<compile_context>
chip_gen: v7x
topology: tpu7x:2x2x1
jax: 0.10.0
libtpu: 0.0.40
codegen_flags: <defaults>
</compile_context>

<pallas_src>
import jax
import jax.numpy as jnp
from jax import lax
from jax.experimental import pallas as pl
from jax.experimental.pallas import tpu as pltpu


def _ncf_fused_kernel(uid_ref, iid_ref, utab_ref, itab_ref, *refs):
    # refs = (W0, b0, W1, b1, ..., Wn-1, bn-1, wa_t, ba, out_ref)
    out_ref = refs[-1]
    wb = refs[:-1]
    n_fc = (len(wb) - 2) // 2

    TB = uid_ref.shape[0]
    nu = utab_ref.shape[0]
    ni = itab_ref.shape[0]
    E = utab_ref.shape[1]

    uid = uid_ref[...]                                   # (TB, 1) int32
    iid = iid_ref[...]                                   # (TB, 1) int32

    # In-kernel embedding gather via one-hot matmul (tables are VMEM resident,
    # gather stays exact in f32; MXU is massively underfilled anyway).
    u_oh = jnp.where(
        lax.broadcasted_iota(jnp.int32, (TB, nu), 1) == uid, 1.0, 0.0)
    i_oh = jnp.where(
        lax.broadcasted_iota(jnp.int32, (TB, ni), 1) == iid, 1.0, 0.0)
    uemb = jnp.dot(u_oh, utab_ref[...], preferred_element_type=jnp.float32)
    iemb = jnp.dot(i_oh, itab_ref[...], preferred_element_type=jnp.float32)

    # Layer 0: concat([uemb, iemb]) @ W0 == uemb @ W0[:E] + iemb @ W0[E:]
    # (splitting W0 avoids an in-kernel lane concat). bf16 MXU, f32 accum.
    w0_ref, b0 = wb[0], wb[1][...]
    acc = jnp.dot(uemb.astype(jnp.bfloat16), w0_ref[0:E, :],
                  preferred_element_type=jnp.float32)
    acc = acc + jnp.dot(iemb.astype(jnp.bfloat16), w0_ref[E:2 * E, :],
                        preferred_element_type=jnp.float32)
    v = jnp.maximum(acc + b0, 0.0)

    # Remaining Linear + ReLU layers (statically unrolled; weights stay
    # VMEM-resident across the batch grid -- constant block index).
    for l in range(1, n_fc):
        w = wb[2 * l][...]                               # (in, out) bf16
        b = wb[2 * l + 1][...]                           # (1, out)  f32
        v = jnp.dot(v.astype(jnp.bfloat16), w,
                    preferred_element_type=jnp.float32) + b
        v = jnp.maximum(v, 0.0)

    # Final affine (out_features == 1): VPU/XLU lane reduction in f32 instead
    # of an N=1 MXU matmul; sigmoid via EUP.
    wa_t = wb[-2][...]                                   # (1, last) f32
    ba = wb[-1][...]                                     # (1, 1)    f32
    logits = jnp.sum(v * wa_t, axis=-1, keepdims=True) + ba
    out_ref[...] = jax.nn.sigmoid(logits)


def _ceil_to(x, m):
    return -(-x // m) * m


def ncf_forward(user_ids, item_ids, params, *, max_batch_tile=1024):
    """Pallas implementation of GripNCFModel.forward (fused gather + MLP)."""
    user_table = params["user_embedding"].astype(jnp.float32)
    item_table = params["item_embedding"].astype(jnp.float32)
    fc = params["fc"]                       # list of (W [in,out], b [1,out])
    wa, ba = params["affine"]               # [last, 1], [1, 1]

    B = int(user_ids.shape[0])

    # Grid/tile: even grid >= 2 (keeps both v7x TensorCores busy; harmless on
    # v5e/v6e), batch tile up to max_batch_tile rows, multiple of 8 sublanes.
    n_tiles = max(2, pl.cdiv(B, max_batch_tile))
    if n_tiles % 2:
        n_tiles += 1
    TB = max(8, _ceil_to(pl.cdiv(B, n_tiles), 8))
    B_pad = n_tiles * TB

    uid = user_ids.astype(jnp.int32).reshape(-1, 1)
    iid = item_ids.astype(jnp.int32).reshape(-1, 1)
    if B_pad != B:
        # Only the tiny int32 id vectors are padded (id 0 is valid; padded
        # rows are sliced off below). No f32 activation padding.
        uid = jnp.pad(uid, ((0, B_pad - B), (0, 0)))
        iid = jnp.pad(iid, ((0, B_pad - B), (0, 0)))

    args = [uid, iid, user_table, item_table]
    in_specs = [
        pl.BlockSpec((TB, 1), lambda i: (i, 0)),
        pl.BlockSpec((TB, 1), lambda i: (i, 0)),
        pl.BlockSpec(user_table.shape, lambda i: (0, 0)),
        pl.BlockSpec(item_table.shape, lambda i: (0, 0)),
    ]
    for W, b in fc:
        Wb = W.astype(jnp.bfloat16)                      # bf16 MXU operands
        bf = b.astype(jnp.float32)
        in_specs.append(pl.BlockSpec(Wb.shape, lambda i: (0, 0)))
        in_specs.append(pl.BlockSpec(bf.shape, lambda i: (0, 0)))
        args += [Wb, bf]
    wa_t = wa.reshape(1, -1).astype(jnp.float32)         # (1, last)
    ba_f = ba.astype(jnp.float32)
    in_specs.append(pl.BlockSpec(wa_t.shape, lambda i: (0, 0)))
    in_specs.append(pl.BlockSpec(ba_f.shape, lambda i: (0, 0)))
    args += [wa_t, ba_f]

    out = pl.pallas_call(
        _ncf_fused_kernel,
        out_shape=jax.ShapeDtypeStruct((B_pad, 1), jnp.float32),
        grid=(n_tiles,),
        in_specs=in_specs,
        out_specs=pl.BlockSpec((TB, 1), lambda i: (i, 0)),
        compiler_params=pltpu.CompilerParams(
            dimension_semantics=("parallel",)),
    )(*args)
    return out if B_pad == B else out[:B]


def init_params(key, num_users, num_items, embedding_dim, layers):
    """Deterministic synthetic init mirroring the PyTorch module's shapes.

    Embedding and Linear weights ~ N(0, 0.01) (as _initialize_weights does);
    Linear biases use torch's default uniform(-1/sqrt(in), 1/sqrt(in)).
    """
    keys = jax.random.split(key, 2 + 2 * len(layers))
    ki = iter(keys)
    params = {
        "user_embedding": 0.01 * jax.random.normal(
            next(ki), (num_users + 1, embedding_dim), jnp.float32),
        "item_embedding": 0.01 * jax.random.normal(
            next(ki), (num_items + 1, embedding_dim), jnp.float32),
    }
    fc = []
    for in_size, out_size in zip(layers[:-1], layers[1:]):
        W = 0.01 * jax.random.normal(next(ki), (in_size, out_size), jnp.float32)
        bound = 1.0 / (in_size ** 0.5)
        b = jax.random.uniform(next(ki), (1, out_size), jnp.float32,
                               minval=-bound, maxval=bound)
        fc.append((W, b))
    params["fc"] = fc

    last = layers[-1]
    Wa = 0.01 * jax.random.normal(next(ki), (last, 1), jnp.float32)
    bound = 1.0 / (last ** 0.5)
    ba = jax.random.uniform(next(ki), (1, 1), jnp.float32,
                            minval=-bound, maxval=bound)
    params["affine"] = (Wa, ba)
    return params


def ncf_reference(user_ids, item_ids, params):
    """Pure-JAX f32 reference of the PyTorch forward (for verification)."""
    uemb = jnp.take(params["user_embedding"], user_ids, axis=0)
    iemb = jnp.take(params["item_embedding"], item_ids, axis=0)
    v = jnp.concatenate([uemb, iemb], axis=-1)
    for W, b in params["fc"]:
        v = jnp.maximum(v @ W + b, 0.0)
    Wa, ba = params["affine"]
    return jax.nn.sigmoid(v @ Wa + ba)


if __name__ == "__main__":
    num_users, num_items = 50, 40
    embedding_dim = 16
    # layers[0] must equal 2 * embedding_dim (concat of user+item embeddings)
    layers = [2 * embedding_dim, 64, 32, 16]
    B = 512   # -> grid=(2,), TB=256 (both v7x TensorCores busy)

    key = jax.random.PRNGKey(0)
    kp, ku, ki = jax.random.split(key, 3)
    params = init_params(kp, num_users, num_items, embedding_dim, layers)

    user_ids = jax.random.randint(ku, (B,), 0, num_users + 1, dtype=jnp.int32)
    item_ids = jax.random.randint(ki, (B,), 0, num_items + 1, dtype=jnp.int32)

    out = ncf_forward(user_ids, item_ids, params)
    out = jax.block_until_ready(out)

    ref = ncf_reference(user_ids, item_ids, params)
    assert out.shape == (B, 1)
    # bf16 MXU path (f32 accumulation): tolerance relaxed vs pure-f32.
    assert jnp.allclose(out, ref, atol=5e-3, rtol=5e-3), (
        float(jnp.max(jnp.abs(out - ref))))

    print("KERNEL_OK")
</pallas_src>

<mosaic_0001>
module attributes {stable_mosaic.version = 11 : i64} {
  func.func @_ncf_fused_kernel(%arg0: i32, %arg1: memref<256x1xi32, #tpu.memory_space<vmem>>, %arg2: memref<256x1xi32, #tpu.memory_space<vmem>>, %arg3: memref<51x16xf32, #tpu.memory_space<vmem>>, %arg4: memref<41x16xf32, #tpu.memory_space<vmem>>, %arg5: memref<32x64xbf16, #tpu.memory_space<vmem>>, %arg6: memref<1x64xf32, #tpu.memory_space<vmem>>, %arg7: memref<64x32xbf16, #tpu.memory_space<vmem>>, %arg8: memref<1x32xf32, #tpu.memory_space<vmem>>, %arg9: memref<32x16xbf16, #tpu.memory_space<vmem>>, %arg10: memref<1x16xf32, #tpu.memory_space<vmem>>, %arg11: memref<1x16xf32, #tpu.memory_space<vmem>>, %arg12: memref<1x1xf32, #tpu.memory_space<vmem>>, %arg13: memref<256x1xf32, #tpu.memory_space<vmem>>) attributes {dimension_semantics = [#tpu.dimension_semantics<parallel>], iteration_bounds = array<i64: 2>, scalar_prefetch = 0 : i64, scratch_operands = 0 : i64, tpu.core_type = #tpu.core_type<tc>, window_params = [{transform_indices = @transform_0, window_bounds = array<i64: 256, 1>}, {transform_indices = @transform_1, window_bounds = array<i64: 256, 1>}, {pipeline_mode = #tpu.pipeline_mode<synchronous>, transform_indices = @transform_2, window_bounds = array<i64: 51, 16>}, {pipeline_mode = #tpu.pipeline_mode<synchronous>, transform_indices = @transform_3, window_bounds = array<i64: 41, 16>}, {pipeline_mode = #tpu.pipeline_mode<synchronous>, transform_indices = @transform_4, window_bounds = array<i64: 32, 64>}, {pipeline_mode = #tpu.pipeline_mode<synchronous>, transform_indices = @transform_5, window_bounds = array<i64: 1, 64>}, {pipeline_mode = #tpu.pipeline_mode<synchronous>, transform_indices = @transform_6, window_bounds = array<i64: 64, 32>}, {pipeline_mode = #tpu.pipeline_mode<synchronous>, transform_indices = @transform_7, window_bounds = array<i64: 1, 32>}, {pipeline_mode = #tpu.pipeline_mode<synchronous>, transform_indices = @transform_8, window_bounds = array<i64: 32, 16>}, {pipeline_mode = #tpu.pipeline_mode<synchronous>, transform_indices = @transform_9, window_bounds = array<i64: 1, 16>}, {pipeline_mode = #tpu.pipeline_mode<synchronous>, transform_indices = @transform_10, window_bounds = array<i64: 1, 16>}, {pipeline_mode = #tpu.pipeline_mode<synchronous>, transform_indices = @transform_11, window_bounds = array<i64: 1, 1>}, {transform_indices = @transform_12, window_bounds = array<i64: 256, 1>}]} {
    %c0 = arith.constant 0 : index
    %c0_0 = arith.constant 0 : index
    %0 = vector.load %arg1[%c0, %c0_0] : memref<256x1xi32, #tpu.memory_space<vmem>>, vector<256x1xi32>
    %c0_1 = arith.constant 0 : index
    %c0_2 = arith.constant 0 : index
    %1 = vector.load %arg2[%c0_1, %c0_2] : memref<256x1xi32, #tpu.memory_space<vmem>>, vector<256x1xi32>
    %2 = tpu.iota {dimensions = array<i32: 1>} : vector<256x51xi32>
    %3 = vector.broadcast %0 : vector<256x1xi32> to vector<256x51xi32>
    %4 = arith.cmpi eq, %2, %3 : vector<256x51xi32>
    %cst = arith.constant 1.000000e+00 : f32
    %cst_3 = arith.constant 0.000000e+00 : f32
    %5 = vector.broadcast %cst : f32 to vector<256x51xf32>
    %6 = vector.broadcast %cst_3 : f32 to vector<256x51xf32>
    %7 = arith.select %4, %5, %6 : vector<256x51xi1>, vector<256x51xf32>
    %8 = tpu.iota {dimensions = array<i32: 1>} : vector<256x41xi32>
    %9 = vector.broadcast %1 : vector<256x1xi32> to vector<256x41xi32>
    %10 = arith.cmpi eq, %8, %9 : vector<256x41xi32>
    %cst_4 = arith.constant 1.000000e+00 : f32
    %cst_5 = arith.constant 0.000000e+00 : f32
    %11 = vector.broadcast %cst_4 : f32 to vector<256x41xf32>
    %12 = vector.broadcast %cst_5 : f32 to vector<256x41xf32>
    %13 = arith.select %10, %11, %12 : vector<256x41xi1>, vector<256x41xf32>
    %c0_6 = arith.constant 0 : index
    %c0_7 = arith.constant 0 : index
    %14 = vector.load %arg3[%c0_6, %c0_7] : memref<51x16xf32, #tpu.memory_space<vmem>>, vector<51x16xf32>
    %cst_8 = arith.constant dense<0.000000e+00> : vector<256x16xf32>
    %15 = tpu.matmul %7, %14, %cst_8 {dimension_numbers = #tpu.dot_dimension_numbers<[1], [0], [0], [1], [0, 0, 1, 1], [], []>} : vector<256x51xf32>, vector<51x16xf32>, vector<256x16xf32> -> vector<256x16xf32>
    %c0_9 = arith.constant 0 : index
    %c0_10 = arith.constant 0 : index
    %16 = vector.load %arg4[%c0_9, %c0_10] : memref<41x16xf32, #tpu.memory_space<vmem>>, vector<41x16xf32>
    %cst_11 = arith.constant dense<0.000000e+00> : vector<256x16xf32>
    %17 = tpu.matmul %13, %16, %cst_11 {dimension_numbers = #tpu.dot_dimension_numbers<[1], [0], [0], [1], [0, 0, 1, 1], [], []>} : vector<256x41xf32>, vector<41x16xf32>, vector<256x16xf32> -> vector<256x16xf32>
    %c0_12 = arith.constant 0 : index
    %c0_13 = arith.constant 0 : index
    %18 = vector.load %arg6[%c0_12, %c0_13] : memref<1x64xf32, #tpu.memory_space<vmem>>, vector<1x64xf32>
    %19 = arith.truncf %15 : vector<256x16xf32> to vector<256x16xbf16>
    %c0_14 = arith.constant 0 : index
    %c0_15 = arith.constant 0 : index
    %20 = vector.load %arg5[%c0_14, %c0_15] : memref<32x64xbf16, #tpu.memory_space<vmem>>, vector<16x64xbf16>
    %cst_16 = arith.constant dense<0.000000e+00> : vector<256x64xf32>
    %21 = tpu.matmul %19, %20, %cst_16 {dimension_numbers = #tpu.dot_dimension_numbers<[1], [0], [0], [1], [0, 0, 1, 1], [], []>} : vector<256x16xbf16>, vector<16x64xbf16>, vector<256x64xf32> -> vector<256x64xf32>
    %22 = arith.truncf %17 : vector<256x16xf32> to vector<256x16xbf16>
    %c16 = arith.constant 16 : index
    %c0_17 = arith.constant 0 : index
    %23 = vector.load %arg5[%c16, %c0_17] : memref<32x64xbf16, #tpu.memory_space<vmem>>, vector<16x64xbf16>
    %cst_18 = arith.constant dense<0.000000e+00> : vector<256x64xf32>
    %24 = tpu.matmul %22, %23, %cst_18 {dimension_numbers = #tpu.dot_dimension_numbers<[1], [0], [0], [1], [0, 0, 1, 1], [], []>} : vector<256x16xbf16>, vector<16x64xbf16>, vector<256x64xf32> -> vector<256x64xf32>
    %25 = arith.addf %21, %24 : vector<256x64xf32>
    %26 = vector.broadcast %18 : vector<1x64xf32> to vector<256x64xf32>
    %27 = arith.addf %25, %26 : vector<256x64xf32>
    %cst_19 = arith.constant 0.000000e+00 : f32
    %28 = vector.broadcast %cst_19 : f32 to vector<256x64xf32>
    %29 = arith.maximumf %27, %28 : vector<256x64xf32>
    %c0_20 = arith.constant 0 : index
    %c0_21 = arith.constant 0 : index
    %30 = vector.load %arg7[%c0_20, %c0_21] : memref<64x32xbf16, #tpu.memory_space<vmem>>, vector<64x32xbf16>
    %c0_22 = arith.constant 0 : index
    %c0_23 = arith.constant 0 : index
    %31 = vector.load %arg8[%c0_22, %c0_23] : memref<1x32xf32, #tpu.memory_space<vmem>>, vector<1x32xf32>
    %32 = arith.truncf %29 : vector<256x64xf32> to vector<256x64xbf16>
    %cst_24 = arith.constant dense<0.000000e+00> : vector<256x32xf32>
    %33 = tpu.matmul %32, %30, %cst_24 {dimension_numbers = #tpu.dot_dimension_numbers<[1], [0], [0], [1], [0, 0, 1, 1], [], []>} : vector<256x64xbf16>, vector<64x32xbf16>, vector<256x32xf32> -> vector<256x32xf32>
    %34 = vector.broadcast %31 : vector<1x32xf32> to vector<256x32xf32>
    %35 = arith.addf %33, %34 : vector<256x32xf32>
    %cst_25 = arith.constant 0.000000e+00 : f32
    %36 = vector.broadcast %cst_25 : f32 to vector<256x32xf32>
    %37 = arith.maximumf %35, %36 : vector<256x32xf32>
    %c0_26 = arith.constant 0 : index
    %c0_27 = arith.constant 0 : index
    %38 = vector.load %arg9[%c0_26, %c0_27] : memref<32x16xbf16, #tpu.memory_space<vmem>>, vector<32x16xbf16>
    %c0_28 = arith.constant 0 : index
    %c0_29 = arith.constant 0 : index
    %39 = vector.load %arg10[%c0_28, %c0_29] : memref<1x16xf32, #tpu.memory_space<vmem>>, vector<1x16xf32>
    %40 = arith.truncf %37 : vector<256x32xf32> to vector<256x32xbf16>
    %cst_30 = arith.constant dense<0.000000e+00> : vector<256x16xf32>
    %41 = tpu.matmul %40, %38, %cst_30 {dimension_numbers = #tpu.dot_dimension_numbers<[1], [0], [0], [1], [0, 0, 1, 1], [], []>} : vector<256x32xbf16>, vector<32x16xbf16>, vector<256x16xf32> -> vector<256x16xf32>
    %42 = vector.broadcast %39 : vector<1x16xf32> to vector<256x16xf32>
    %43 = arith.addf %41, %42 : vector<256x16xf32>
    %cst_31 = arith.constant 0.000000e+00 : f32
    %44 = vector.broadcast %cst_31 : f32 to vector<256x16xf32>
    %45 = arith.maximumf %43, %44 : vector<256x16xf32>
    %c0_32 = arith.constant 0 : index
    %c0_33 = arith.constant 0 : index
    %46 = vector.load %arg11[%c0_32, %c0_33] : memref<1x16xf32, #tpu.memory_space<vmem>>, vector<1x16xf32>
    %c0_34 = arith.constant 0 : index
    %c0_35 = arith.constant 0 : index
    %47 = vector.load %arg12[%c0_34, %c0_35] : memref<1x1xf32, #tpu.memory_space<vmem>>, vector<1x1xf32>
    %48 = vector.broadcast %46 : vector<1x16xf32> to vector<256x16xf32>
    %49 = arith.mulf %45, %48 : vector<256x16xf32>
    %cst_36 = arith.constant dense<0.000000e+00> : vector<256xf32>
    %50 = vector.multi_reduction <add>, %49, %cst_36 [1] : vector<256x16xf32> to vector<256xf32>
    %51 = vector.shape_cast %50 : vector<256xf32> to vector<256x1xf32>
    %52 = vector.broadcast %47 : vector<1x1xf32> to vector<256x1xf32>
    %53 = arith.addf %51, %52 : vector<256x1xf32>
    %54 = arith.negf %53 : vector<256x1xf32>
    %55 = math.exp %54 : vector<256x1xf32>
    %cst_37 = arith.constant 1.000000e+00 : f32
    %56 = vector.broadcast %cst_37 : f32 to vector<256x1xf32>
    %57 = arith.addf %56, %55 : vector<256x1xf32>
    %58 = arith.divf %56, %57 : vector<256x1xf32>
    %c0_38 = arith.constant 0 : index
    %c0_39 = arith.constant 0 : index
    %59 = vector.load %arg13[%c0_38, %c0_39] : memref<256x1xf32, #tpu.memory_space<vmem>>, vector<256x1xf32>
    tpu.vector_store %arg13[%c0_38, %c0_39], %58 {strides = array<i32>} : memref<256x1xf32, #tpu.memory_space<vmem>>, vector<256x1xf32>,
    return
  }
  func.func @transform_0(%arg0: i32) -> (i32, i32) {
    %c0_i32 = arith.constant 0 : i32
    %c0_i32_0 = arith.constant 0 : i32
    return %arg0, %c0_i32 : i32, i32
  }
  func.func @transform_1(%arg0: i32) -> (i32, i32) {
    %c0_i32 = arith.constant 0 : i32
    %c0_i32_0 = arith.constant 0 : i32
    return %arg0, %c0_i32 : i32, i32
  }
  func.func @transform_2(%arg0: i32) -> (i32, i32) {
    %c0_i32 = arith.constant 0 : i32
    %c0_i32_0 = arith.constant 0 : i32
    %c0_i32_1 = arith.constant 0 : i32
    return %c0_i32, %c0_i32_0 : i32, i32
  }
  func.func @transform_3(%arg0: i32) -> (i32, i32) {
    %c0_i32 = arith.constant 0 : i32
    %c0_i32_0 = arith.constant 0 : i32
    %c0_i32_1 = arith.constant 0 : i32
    return %c0_i32, %c0_i32_0 : i32, i32
  }
  func.func @transform_4(%arg0: i32) -> (i32, i32) {
    %c0_i32 = arith.constant 0 : i32
    %c0_i32_0 = arith.constant 0 : i32
    %c0_i32_1 = arith.constant 0 : i32
    return %c0_i32, %c0_i32_0 : i32, i32
  }
  func.func @transform_5(%arg0: i32) -> (i32, i32) {
    %c0_i32 = arith.constant 0 : i32
    %c0_i32_0 = arith.constant 0 : i32
    %c0_i32_1 = arith.constant 0 : i32
    return %c0_i32, %c0_i32_0 : i32, i32
  }
  func.func @transform_6(%arg0: i32) -> (i32, i32) {
    %c0_i32 = arith.constant 0 : i32
    %c0_i32_0 = arith.constant 0 : i32
    %c0_i32_1 = arith.constant 0 : i32
    return %c0_i32, %c0_i32_0 : i32, i32
  }
  func.func @transform_7(%arg0: i32) -> (i32, i32) {
    %c0_i32 = arith.constant 0 : i32
    %c0_i32_0 = arith.constant 0 : i32
    %c0_i32_1 = arith.constant 0 : i32
    return %c0_i32, %c0_i32_0 : i32, i32
  }
  func.func @transform_8(%arg0: i32) -> (i32, i32) {
    %c0_i32 = arith.constant 0 : i32
    %c0_i32_0 = arith.constant 0 : i32
    %c0_i32_1 = arith.constant 0 : i32
    return %c0_i32, %c0_i32_0 : i32, i32
  }
  func.func @transform_9(%arg0: i32) -> (i32, i32) {
    %c0_i32 = arith.constant 0 : i32
    %c0_i32_0 = arith.constant 0 : i32
    %c0_i32_1 = arith.constant 0 : i32
    return %c0_i32, %c0_i32_0 : i32, i32
  }
  func.func @transform_10(%arg0: i32) -> (i32, i32) {
    %c0_i32 = arith.constant 0 : i32
    %c0_i32_0 = arith.constant 0 : i32
    %c0_i32_1 = arith.constant 0 : i32
    return %c0_i32, %c0_i32_0 : i32, i32
  }
  func.func @transform_11(%arg0: i32) -> (i32, i32) {
    %c0_i32 = arith.constant 0 : i32
    %c0_i32_0 = arith.constant 0 : i32
    %c0_i32_1 = arith.constant 0 : i32
    return %c0_i32, %c0_i32_0 : i32, i32
  }
  func.func @transform_12(%arg0: i32) -> (i32, i32) {
    %c0_i32 = arith.constant 0 : i32
    %c0_i32_0 = arith.constant 0 : i32
    return %arg0, %c0_i32 : i32, i32
  }
}

</mosaic_0001>

<llo_original>
// kernel: tpu_custom_call.1
$region0: #{tpu_custom_call.1}
  #allocation0 [shape = 'u32[]', space=smem, size = 0x4, offset = 0x4, fixed_abs, tag = 'smem constant byte address 0x4 - core index']
  #allocation1 [shape = 'u32[144,128]{1,0:T(1,128)}', space=vmem, size = 0x12000, scoped, tag = 'internal scratch']
  #allocation2 [shape = 'f32[1,1]{1,0:T(1,128)S(1)}', space=vmem, size = 0x200, scoped, tag = 'scoped memory for tpu_custom_call.1']
  %s0 = inlined_call_operand.vmem [shape: s32[512,1], index: 0, kind: input, shape index: {}]
  %s1 = inlined_call_operand.vmem [shape: s32[512,1], index: 1, kind: input, shape index: {}]
  %s2 = inlined_call_operand.vmem [shape: f32[51,16], index: 2, kind: input, shape index: {}]
  %s3 = inlined_call_operand.vmem [shape: f32[41,16], index: 3, kind: input, shape index: {}]
  %s4 = inlined_call_operand.vmem [shape: bf16[32,64], index: 4, kind: input, shape index: {}]
  %s5 = inlined_call_operand.vmem [shape: f32[1,64], index: 5, kind: input, shape index: {}]
  %s6 = inlined_call_operand.vmem [shape: bf16[64,32], index: 6, kind: input, shape index: {}]
  %s7 = inlined_call_operand.vmem [shape: f32[1,32], index: 7, kind: input, shape index: {}]
  %s8 = inlined_call_operand.vmem [shape: bf16[32,16], index: 8, kind: input, shape index: {}]
  %s9 = inlined_call_operand.vmem [shape: f32[1,16], index: 9, kind: input, shape index: {}]
  %s10 = inlined_call_operand.vmem [shape: f32[1,16], index: 10, kind: input, shape index: {}]
  %s11 = inlined_call_operand.<no memory space> [shape: f32[1,1], index: 11, kind: input, shape index: {}]
  %s12 = inlined_call_operand.vmem [shape: f32[512,1], index: 12, kind: output, shape index: {}]
  %s13 = sld [smem:[#allocation0]]
  $region81: #{tpu_custom_call.1} parent=0
    _
  %s15 = ssub.s32 1, %s13
  %s16 = scalar_select 0, %s15, %s13
  %v17 = vstv %s11
  %18 = vst [vmem:[#allocation2] sm:$0x1] %v17
  loop: start=0, step=1, limit=4
  $region2: #{tpu_custom_call.1} parent=0 // loop_pre_header
    _
  $region3: #{tpu_custom_call.1} parent=0 // loop_header
    %s20 = sphi 0, %s24
    %p21 = scmp.ge.s32.totalorder %s20, 4
    %s30 = sphi 0, %s32
    %s33 = sphi 0, %s30
    %s34 = sphi 0, %s33
    %s50 = sphi 0, %s34
    %s56 = sphi 0, %s58
    %s59 = sphi 0, %s56
    %s60 = sphi 0, %s59
    %s76 = sphi 0, %s60
    %s80 = sphi 0, %s80
    %s82 = sphi 0, %s80
    %s83 = sphi 0, %s82
    %s97 = sphi 0, %s83
    %s101 = sphi 0, %s101
    %s103 = sphi 0, %s101
    %s104 = sphi 0, %s103
    %s118 = sphi 0, %s104
    %s122 = sphi 0, %s122
    %s124 = sphi 0, %s122
    %s125 = sphi 0, %s124
    %s139 = sphi 0, %s125
    %s143 = sphi 0, %s143
    %s145 = sphi 0, %s143
    %s146 = sphi 0, %s145
    %s160 = sphi 0, %s146
    %s164 = sphi 0, %s164
    %s166 = sphi 0, %s164
    %s167 = sphi 0, %s166
    %s181 = sphi 0, %s167
    %s185 = sphi 0, %s185
    %s187 = sphi 0, %s185
    %s188 = sphi 0, %s187
    %s202 = sphi 0, %s188
    %s206 = sphi 0, %s206
    %s208 = sphi 0, %s206
    %s209 = sphi 0, %s208
    %s223 = sphi 0, %s209
    %s227 = sphi 0, %s227
    %s229 = sphi 0, %s227
    %s230 = sphi 0, %s229
    %s244 = sphi 0, %s230
    %s248 = sphi 0, %s248
    %s250 = sphi 0, %s248
    %s251 = sphi 0, %s250
    %s265 = sphi 0, %s251
    %s269 = sphi 0, %s269
    %s271 = sphi 0, %s269
    %s272 = sphi 0, %s271
    %s286 = sphi 0, %s272
    %s292 = sphi 0, %s294
    %s295 = sphi 0, %s292
    %s296 = sphi 0, %s295
    %s312 = sphi 0, %s296
  $region4: #{tpu_custom_call.1} parent=0 // loop_header_branch
    %23 = sbr.rel (%p21) target = $region8
  $region5: #{tpu_custom_call.1} parent=0 // loop_body
    %s25 = ssub.s32 %s20, 1
    %s26 = ssub.s32 %s20, 2
    %s27 = sadd.s32 %s20, 1
    %s28 = ssub.s32 %s20, %s27
    %p29 = scmp.eq.s32.totalorder %s28, 0
    %s31 = sadd.s32 %s30, 1
    %s32 = scalar_select %p29, %s30, %s31
    %p35 = pneg %p29
    %p36 = scmp.eq.s32.totalorder %s20, 1
    %p37 = por %p35, %p36
    %p38 = scmp.ne.s32.totalorder %s30, %s33
    %p39 = scmp.eq.s32.totalorder %s20, 0
    %p40 = por %p38, %p39
    %p41 = scmp.ne.s32.totalorder %s30, %s33
    %p42 = scmp.eq.s32.totalorder %s25, 1
    %p43 = por %p41, %p42
    %p44 = scmp.ne.s32.totalorder %s33, %s34
    %p45 = scmp.eq.s32.totalorder %s25, 0
    %p46 = por %p44, %p45
    %p47 = scmp.ne.s32.totalorder %s33, %s34
    %p48 = scmp.eq.s32.totalorder %s26, 1
    %p49 = por %p47, %p48
    %p51 = scmp.ne.s32.totalorder %s34, %s50
    %p52 = scmp.eq.s32.totalorder %s26, 0
    %p53 = por %p51, %p52
    %s54 = ssub.s32 %s20, %s27
    %p55 = scmp.eq.s32.totalorder %s54, 0
    %s57 = sadd.s32 %s56, 1
    %s58 = scalar_select %p55, %s56, %s57
    %p61 = pneg %p55
    %p62 = scmp.eq.s32.totalorder %s20, 1
    %p63 = por %p61, %p62
    %p64 = scmp.ne.s32.totalorder %s56, %s59
    %p65 = scmp.eq.s32.totalorder %s20, 0
    %p66 = por %p64, %p65
    %p67 = scmp.ne.s32.totalorder %s56, %s59
    %p68 = scmp.eq.s32.totalorder %s25, 1
    %p69 = por %p67, %p68
    %p70 = scmp.ne.s32.totalorder %s59, %s60
    %p71 = scmp.eq.s32.totalorder %s25, 0
    %p72 = por %p70, %p71
    %p73 = scmp.ne.s32.totalorder %s59, %s60
    %p74 = scmp.eq.s32.totalorder %s26, 1
    %p75 = por %p73, %p74
    %p77 = scmp.ne.s32.totalorder %s60, %s76
    %p78 = scmp.eq.s32.totalorder %s26, 0
    %p79 = por %p77, %p78
    %s81 = sadd.s32 %s80, 1
    %p84 = scmp.eq.s32.totalorder %s20, 1
    %p85 = scmp.ne.s32.totalorder %s80, %s82
    %p86 = scmp.eq.s32.totalorder %s20, 0
    %p87 = por %p85, %p86
    %p88 = scmp.ne.s32.totalorder %s80, %s82
    %p89 = scmp.eq.s32.totalorder %s25, 1
    %p90 = por %p88, %p89
    %p91 = scmp.ne.s32.totalorder %s82, %s83
    %p92 = scmp.eq.s32.totalorder %s25, 0
    %p93 = por %p91, %p92
    %p94 = scmp.ne.s32.totalorder %s82, %s83
    %p95 = scmp.eq.s32.totalorder %s26, 1
    %p96 = por %p94, %p95
    %p98 = scmp.ne.s32.totalorder %s83, %s97
    %p99 = scmp.eq.s32.totalorder %s26, 0
    %p100 = por %p98, %p99
    %s102 = sadd.s32 %s101, 1
    %p105 = scmp.eq.s32.totalorder %s20, 1
    %p106 = scmp.ne.s32.totalorder %s101, %s103
    %p107 = scmp.eq.s32.totalorder %s20, 0
    %p108 = por %p106, %p107
    %p109 = scmp.ne.s32.totalorder %s101, %s103
    %p110 = scmp.eq.s32.totalorder %s25, 1
    %p111 = por %p109, %p110
    %p112 = scmp.ne.s32.totalorder %s103, %s104
    %p113 = scmp.eq.s32.totalorder %s25, 0
    %p114 = por %p112, %p113
    %p115 = scmp.ne.s32.totalorder %s103, %s104
    %p116 = scmp.eq.s32.totalorder %s26, 1
    %p117 = por %p115, %p116
    %p119 = scmp.ne.s32.totalorder %s104, %s118
    %p120 = scmp.eq.s32.totalorder %s26, 0
    %p121 = por %p119, %p120
    %s123 = sadd.s32 %s122, 1
    %p126 = scmp.eq.s32.totalorder %s20, 1
    %p127 = scmp.ne.s32.totalorder %s122, %s124
    %p128 = scmp.eq.s32.totalorder %s20, 0
    %p129 = por %p127, %p128
    %p130 = scmp.ne.s32.totalorder %s122, %s124
    %p131 = scmp.eq.s32.totalorder %s25, 1
    %p132 = por %p130, %p131
    %p133 = scmp.ne.s32.totalorder %s124, %s125
    %p134 = scmp.eq.s32.totalorder %s25, 0
    %p135 = por %p133, %p134
    %p136 = scmp.ne.s32.totalorder %s124, %s125
    %p137 = scmp.eq.s32.totalorder %s26, 1
    %p138 = por %p136, %p137
    %p140 = scmp.ne.s32.totalorder %s125, %s139
    %p141 = scmp.eq.s32.totalorder %s26, 0
    %p142 = por %p140, %p141
    %s144 = sadd.s32 %s143, 1
    %p147 = scmp.eq.s32.totalorder %s20, 1
    %p148 = scmp.ne.s32.totalorder %s143, %s145
    %p149 = scmp.eq.s32.totalorder %s20, 0
    %p150 = por %p148, %p149
    %p151 = scmp.ne.s32.totalorder %s143, %s145
    %p152 = scmp.eq.s32.totalorder %s25, 1
    %p153 = por %p151, %p152
    %p154 = scmp.ne.s32.totalorder %s145, %s146
    %p155 = scmp.eq.s32.totalorder %s25, 0
    %p156 = por %p154, %p155
    %p157 = scmp.ne.s32.totalorder %s145, %s146
    %p158 = scmp.eq.s32.totalorder %s26, 1
    %p159 = por %p157, %p158
    %p161 = scmp.ne.s32.totalorder %s146, %s160
    %p162 = scmp.eq.s32.totalorder %s26, 0
    %p163 = por %p161, %p162
    %s165 = sadd.s32 %s164, 1
    %p168 = scmp.eq.s32.totalorder %s20, 1
    %p169 = scmp.ne.s32.totalorder %s164, %s166
    %p170 = scmp.eq.s32.totalorder %s20, 0
    %p171 = por %p169, %p170
    %p172 = scmp.ne.s32.totalorder %s164, %s166
    %p173 = scmp.eq.s32.totalorder %s25, 1
    %p174 = por %p172, %p173
    %p175 = scmp.ne.s32.totalorder %s166, %s167
    %p176 = scmp.eq.s32.totalorder %s25, 0
    %p177 = por %p175, %p176
    %p178 = scmp.ne.s32.totalorder %s166, %s167
    %p179 = scmp.eq.s32.totalorder %s26, 1
    %p180 = por %p178, %p179
    %p182 = scmp.ne.s32.totalorder %s167, %s181
    %p183 = scmp.eq.s32.totalorder %s26, 0
    %p184 = por %p182, %p183
    %s186 = sadd.s32 %s185, 1
    %p189 = scmp.eq.s32.totalorder %s20, 1
    %p190 = scmp.ne.s32.totalorder %s185, %s187
    %p191 = scmp.eq.s32.totalorder %s20, 0
    %p192 = por %p190, %p191
    %p193 = scmp.ne.s32.totalorder %s185, %s187
    %p194 = scmp.eq.s32.totalorder %s25, 1
    %p195 = por %p193, %p194
    %p196 = scmp.ne.s32.totalorder %s187, %s188
    %p197 = scmp.eq.s32.totalorder %s25, 0
    %p198 = por %p196, %p197
    %p199 = scmp.ne.s32.totalorder %s187, %s188
    %p200 = scmp.eq.s32.totalorder %s26, 1
    %p201 = por %p199, %p200
    %p203 = scmp.ne.s32.totalorder %s188, %s202
    %p204 = scmp.eq.s32.totalorder %s26, 0
    %p205 = por %p203, %p204
    %s207 = sadd.s32 %s206, 1
    %p210 = scmp.eq.s32.totalorder %s20, 1
    %p211 = scmp.ne.s32.totalorder %s206, %s208
    %p212 = scmp.eq.s32.totalorder %s20, 0
    %p213 = por %p211, %p212
    %p214 = scmp.ne.s32.totalorder %s206, %s208
    %p215 = scmp.eq.s32.totalorder %s25, 1
    %p216 = por %p214, %p215
    %p217 = scmp.ne.s32.totalorder %s208, %s209
    %p218 = scmp.eq.s32.totalorder %s25, 0
    %p219 = por %p217, %p218
    %p220 = scmp.ne.s32.totalorder %s208, %s209
    %p221 = scmp.eq.s32.totalorder %s26, 1
    %p222 = por %p220, %p221
    %p224 = scmp.ne.s32.totalorder %s209, %s223
    %p225 = scmp.eq.s32.totalorder %s26, 0
    %p226 = por %p224, %p225
    %s228 = sadd.s32 %s227, 1
    %p231 = scmp.eq.s32.totalorder %s20, 1
    %p232 = scmp.ne.s32.totalorder %s227, %s229
    %p233 = scmp.eq.s32.totalorder %s20, 0
    %p234 = por %p232, %p233
    %p235 = scmp.ne.s32.totalorder %s227, %s229
    %p236 = scmp.eq.s32.totalorder %s25, 1
    %p237 = por %p235, %p236
    %p238 = scmp.ne.s32.totalorder %s229, %s230
    %p239 = scmp.eq.s32.totalorder %s25, 0
    %p240 = por %p238, %p239
    %p241 = scmp.ne.s32.totalorder %s229, %s230
    %p242 = scmp.eq.s32.totalorder %s26, 1
    %p243 = por %p241, %p242
    %p245 = scmp.ne.s32.totalorder %s230, %s244
    %p246 = scmp.eq.s32.totalorder %s26, 0
    %p247 = por %p245, %p246
    %s249 = sadd.s32 %s248, 1
    %p252 = scmp.eq.s32.totalorder %s20, 1
    %p253 = scmp.ne.s32.totalorder %s248, %s250
    %p254 = scmp.eq.s32.totalorder %s20, 0
    %p255 = por %p253, %p254
    %p256 = scmp.ne.s32.totalorder %s248, %s250
    %p257 = scmp.eq.s32.totalorder %s25, 1
    %p258 = por %p256, %p257
    %p259 = scmp.ne.s32.totalorder %s250, %s251
    %p260 = scmp.eq.s32.totalorder %s25, 0
    %p261 = por %p259, %p260
    %p262 = scmp.ne.s32.totalorder %s250, %s251
    %p263 = scmp.eq.s32.totalorder %s26, 1
    %p264 = por %p262, %p263
    %p266 = scmp.ne.s32.totalorder %s251, %s265
    %p267 = scmp.eq.s32.totalorder %s26, 0
    %p268 = por %p266, %p267
    %s270 = sadd.s32 %s269, 1
    %p273 = scmp.eq.s32.totalorder %s20, 1
    %p274 = scmp.ne.s32.totalorder %s269, %s271
    %p275 = scmp.eq.s32.totalorder %s20, 0
    %p276 = por %p274, %p275
    %p277 = scmp.ne.s32.totalorder %s269, %s271
    %p278 = scmp.eq.s32.totalorder %s25, 1
    %p279 = por %p277, %p278
    %p280 = scmp.ne.s32.totalorder %s271, %s272
    %p281 = scmp.eq.s32.totalorder %s25, 0
    %p282 = por %p280, %p281
    %p283 = scmp.ne.s32.totalorder %s271, %s272
    %p284 = scmp.eq.s32.totalorder %s26, 1
    %p285 = por %p283, %p284
    %p287 = scmp.ne.s32.totalorder %s272, %s286
    %p288 = scmp.eq.s32.totalorder %s26, 0
    %p289 = por %p287, %p288
    %s290 = ssub.s32 %s20, %s27
    %p291 = scmp.eq.s32.totalorder %s290, 0
    %s293 = sadd.s32 %s292, 1
    %s294 = scalar_select %p291, %s292, %s293
    %p297 = pneg %p291
    %p298 = scmp.eq.s32.totalorder %s20, 1
    %p299 = por %p297, %p298
    %p300 = scmp.ne.s32.totalorder %s292, %s295
    %p301 = scmp.eq.s32.totalorder %s20, 0
    %p302 = por %p300, %p301
    %p303 = scmp.ne.s32.totalorder %s292, %s295
    %p304 = scmp.eq.s32.totalorder %s25, 1
    %p305 = por %p303, %p304
    %p306 = scmp.ne.s32.totalorder %s295, %s296
    %p307 = scmp.eq.s32.totalorder %s25, 0
    %p308 = por %p306, %p307
    %p309 = scmp.ne.s32.totalorder %s295, %s296
    %p310 = scmp.eq.s32.totalorder %s26, 1
    %p311 = por %p309, %p310
    %p313 = scmp.ne.s32.totalorder %s296, %s312
    %p314 = scmp.eq.s32.totalorder %s26, 0
    %p315 = por %p313, %p314
    %p316 = scmp.le.s32.totalorder 1, %s20
    %p317 = scmp.lt.s32.totalorder %s20, 3
    %p318 = pnand %p316, %p317
    %p319 = pneg %p318
    // Predicated region
    $region9: #{tpu_custom_call.1} parent=5 // pred_check
      _
    $region10: #{tpu_custom_call.1} parent=5 // pred_check_branch
      %321 = sbr.rel (%p318) target = $region12
    $region11: #{tpu_custom_call.1} parent=5 // pred_region
      %s322 = ssub.s32 %s20, 1
      // Predicated region
      $region13: #{tpu_custom_call.1} parent=11 // pred_check
        %p323 = pneg %p93
      $region14: #{tpu_custom_call.1} parent=11 // pred_check_branch
        %325 = sbr.rel (%p323) target = $region16
      $region15: #{tpu_custom_call.1} parent=11 // pred_region
        _
      $region16: #{tpu_custom_call.1} parent=11 // pred_fallthru
        _
      // Predicated region
      $region17: #{tpu_custom_call.1} parent=11 // pred_check
        %p326 = pneg %p114
      $region18: #{tpu_custom_call.1} parent=11 // pred_check_branch
        %328 = sbr.rel (%p326) target = $region20
      $region19: #{tpu_custom_call.1} parent=11 // pred_region
        _
      $region20: #{tpu_custom_call.1} parent=11 // pred_fallthru
        _
      // Predicated region
      $region21: #{tpu_custom_call.1} parent=11 // pred_check
        %p329 = pneg %p135
      $region22: #{tpu_custom_call.1} parent=11 // pred_check_branch
        %331 = sbr.rel (%p329) target = $region24
      $region23: #{tpu_custom_call.1} parent=11 // pred_region
        _
      $region24: #{tpu_custom_call.1} parent=11 // pred_fallthru
        _
      // Predicated region
      $region25: #{tpu_custom_call.1} parent=11 // pred_check
        %p332 = pneg %p156
      $region26: #{tpu_custom_call.1} parent=11 // pred_check_branch
        %334 = sbr.rel (%p332) target = $region28
      $region27: #{tpu_custom_call.1} parent=11 // pred_region
        _
      $region28: #{tpu_custom_call.1} parent=11 // pred_fallthru
        _
      // Predicated region
      $region29: #{tpu_custom_call.1} parent=11 // pred_check
        %p335 = pneg %p177
      $region30: #{tpu_custom_call.1} parent=11 // pred_check_branch
        %337 = sbr.rel (%p335) target = $region32
      $region31: #{tpu_custom_call.1} parent=11 // pred_region
        _
      $region32: #{tpu_custom_call.1} parent=11 // pred_fallthru
        _
      // Predicated region
      $region33: #{tpu_custom_call.1} parent=11 // pred_check
        %p338 = pneg %p198
      $region34: #{tpu_custom_call.1} parent=11 // pred_check_branch
        %340 = sbr.rel (%p338) target = $region36
      $region35: #{tpu_custom_call.1} parent=11 // pred_region
        _
      $region36: #{tpu_custom_call.1} parent=11 // pred_fallthru
        _
      // Predicated region
      $region37: #{tpu_custom_call.1} parent=11 // pred_check
        %p341 = pneg %p219
      $region38: #{tpu_custom_call.1} parent=11 // pred_check_branch
        %343 = sbr.rel (%p341) target = $region40
      $region39: #{tpu_custom_call.1} parent=11 // pred_region
        _
      $region40: #{tpu_custom_call.1} parent=11 // pred_fallthru
        _
      // Predicated region
      $region41: #{tpu_custom_call.1} parent=11 // pred_check
        %p344 = pneg %p240
      $region42: #{tpu_custom_call.1} parent=11 // pred_check_branch
        %346 = sbr.rel (%p344) target = $region44
      $region43: #{tpu_custom_call.1} parent=11 // pred_region
        _
      $region44: #{tpu_custom_call.1} parent=11 // pred_fallthru
        _
      // Predicated region
      $region45: #{tpu_custom_call.1} parent=11 // pred_check
        %p347 = pneg %p261
      $region46: #{tpu_custom_call.1} parent=11 // pred_check_branch
        %349 = sbr.rel (%p347) target = $region48
      $region47: #{tpu_custom_call.1} parent=11 // pred_region
        _
      $region48: #{tpu_custom_call.1} parent=11 // pred_fallthru
        _
      // Predicated region
      $region49: #{tpu_custom_call.1} parent=11 // pred_check
        %p350 = pneg %p282
      $region50: #{tpu_custom_call.1} parent=11 // pred_check_branch
        %352 = sbr.rel (%p350) target = $region52
      $region51: #{tpu_custom_call.1} parent=11 // pred_region
        _
      $region52: #{tpu_custom_call.1} parent=11 // pred_fallthru
        _
    $region12: #{tpu_custom_call.1} parent=5 // pred_fallthru
      _
    %p353 = scmp.lt.s32.totalorder %s20, 2
    // Predicated region
    $region53: #{tpu_custom_call.1} parent=5 // pred_check
      %p354 = pneg %p353
    $region54: #{tpu_custom_call.1} parent=5 // pred_check_branch
      %356 = sbr.rel (%p354) target = $region56
    $region55: #{tpu_custom_call.1} parent=5 // pred_region
      // Predicated region
      $region57: #{tpu_custom_call.1} parent=55 // pred_check
        %p357 = pneg %p40
      $region58: #{tpu_custom_call.1} parent=55 // pred_check_branch
        %359 = sbr.rel (%p357) target = $region60
      $region59: #{tpu_custom_call.1} parent=55 // pred_region
        %s360 = smul.u32 32, %s20
        %p361 = scmp.lt.s32.totalorder %s360, 63
        %s362 = scalar_select %p361, %s360, 63
        %s363 = smul.addr %s362, 8
        %s364 = scalar_lea.vmem %s0, %s363
        %s365 = smul.u32 32, %s20
      $region60: #{tpu_custom_call.1} parent=55 // pred_fallthru
        _
      // Predicated region
      $region61: #{tpu_custom_call.1} parent=55 // pred_check
        %p366 = pneg %p66
      $region62: #{tpu_custom_call.1} parent=55 // pred_check_branch
        %368 = sbr.rel (%p366) target = $region64
      $region63: #{tpu_custom_call.1} parent=55 // pred_region
        %s369 = smul.u32 32, %s20
        %p370 = scmp.lt.s32.totalorder %s369, 63
        %s371 = scalar_select %p370, %s369, 63
        %s372 = smul.addr %s371, 8
        %s373 = scalar_lea.vmem %s1, %s372
        %s374 = smul.u32 32, %s20
      $region64: #{tpu_custom_call.1} parent=55 // pred_fallthru
        _
    $region56: #{tpu_custom_call.1} parent=5 // pred_fallthru
      _
    %p375 = scmp.le.s32.totalorder 1, %s20
    %p376 = scmp.lt.s32.totalorder %s20, 3
    %p377 = pnand %p375, %p376
    %p378 = pneg %p377
    // Predicated region
    $region65: #{tpu_custom_call.1} parent=5 // pred_check
      _
    $region66: #{tpu_custom_call.1} parent=5 // pred_check_branch
      %380 = sbr.rel (%p377) target = $region68
    $region67: #{tpu_custom_call.1} parent=5 // pred_region
      %s381 = ssub.s32 %s20, 1
      %s382 = smul.u32 32, %s25
      %p383 = scmp.lt.s32.totalorder %s382, 63
      %s384 = scalar_select %p383, %s382, 63
      %s385 = smul.addr %s384, 8
      %s386 = scalar_lea.vmem %s0, %s385
      %p387 = pneg %p46
      %p388 = pneg %p43
      %s389 = smul.u32 32, %s25
      %p390 = scmp.lt.s32.totalorder %s389, 63
      %s391 = scalar_select %p390, %s389, 63
      %s392 = smul.addr %s391, 8
      %s393 = scalar_lea.vmem %s1, %s392
      %p394 = pneg %p72
      %p395 = pneg %p69
      %p396 = pneg %p93
      %p397 = pneg %p90
      %p398 = pneg %p114
      %p399 = pneg %p111
      %p400 = pneg %p135
      %p401 = pneg %p132
      %p402 = pneg %p156
      %p403 = pneg %p153
      %p404 = pneg %p177
      %p405 = pneg %p174
      %p406 = pneg %p198
      %p407 = pneg %p195
      %p408 = pneg %p219
      %p409 = pneg %p216
      %p410 = pneg %p240
      %p411 = pneg %p237
      %p412 = pneg %p261
      %p413 = pneg %p258
      %p414 = pneg %p282
      %p415 = pneg %p279
      %p416 = pneg %p308
      %p417 = pneg %p305
      %s418 = smul.u32 32, %s25
      %p419 = scmp.lt.s32.totalorder %s418, 63
      %s420 = scalar_select %p419, %s418, 63
      %s421 = smul.addr %s420, 8
      %s422 = scalar_lea.vmem %s12, %s421
      %s423 = smul.u32 32, %s25
      %p424 = scmp.lt.s32.totalorder %s423, 63
      %s425 = scalar_select %p424, %s423, 63
      %s426 = smul.addr %s425, 8
      %s427 = scalar_lea.vmem %s0, %s426
      %s428 = smul.u32 32, %s25
      %s429 = smul.u32 32, %s25
      %p430 = scmp.lt.s32.totalorder %s429, 63
      %s431 = scalar_select %p430, %s429, 63
      %s432 = smul.addr %s431, 8
      %s433 = scalar_lea.vmem %s1, %s432
      %s434 = smul.u32 32, %s25
      %s435 = smul.u32 32, %s25
      %p436 = scmp.lt.s32.totalorder %s435, 63
      %s437 = scalar_select %p436, %s435, 63
      %s438 = smul.addr %s437, 8
      %s439 = scalar_lea.vmem %s12, %s438
      %s440 = smul.u32 32, %s25
      %v442 = vld [vmem:[%s427] sm:$0xff]
      %v443 = vld [vmem:[%s427 + $0x8] sm:$0xff]
      %v444 = vld [vmem:[%s427 + $0x10] sm:$0xff]
      %v445 = vld [vmem:[%s427 + $0x18] sm:$0xff]
      %v446 = vld [vmem:[%s427 + $0x20] sm:$0xff]
      %v447 = vld [vmem:[%s427 + $0x28] sm:$0xff]
      %v448 = vld [vmem:[%s427 + $0x30] sm:$0xff]
      %v449 = vld [vmem:[%s427 + $0x38] sm:$0xff]
      %v450 = vld [vmem:[%s427 + $0x40] sm:$0xff]
      %v451 = vld [vmem:[%s427 + $0x48] sm:$0xff]
      %v452 = vld [vmem:[%s427 + $0x50] sm:$0xff]
      %v453 = vld [vmem:[%s427 + $0x58] sm:$0xff]
      %v454 = vld [vmem:[%s427 + $0x60] sm:$0xff]
      %v455 = vld [vmem:[%s427 + $0x68] sm:$0xff]
      %v456 = vld [vmem:[%s427 + $0x70] sm:$0xff]
      %v457 = vld [vmem:[%s427 + $0x78] sm:$0xff]
      %v458 = vld [vmem:[%s427 + $0x80] sm:$0xff]
      %v459 = vld [vmem:[%s427 + $0x88] sm:$0xff]
      %v460 = vld [vmem:[%s427 + $0x90] sm:$0xff]
      %v461 = vld [vmem:[%s427 + $0x98] sm:$0xff]
      %v462 = vld [vmem:[%s427 + $0xa0] sm:$0xff]
      %v463 = vld [vmem:[%s427 + $0xa8] sm:$0xff]
      %v464 = vld [vmem:[%s427 + $0xb0] sm:$0xff]
      %v465 = vld [vmem:[%s427 + $0xb8] sm:$0xff]
      %v466 = vld [vmem:[%s427 + $0xc0] sm:$0xff]
      %v467 = vld [vmem:[%s427 + $0xc8] sm:$0xff]
      %v468 = vld [vmem:[%s427 + $0xd0] sm:$0xff]
      %v469 = vld [vmem:[%s427 + $0xd8] sm:$0xff]
      %v470 = vld [vmem:[%s427 + $0xe0] sm:$0xff]
      %v471 = vld [vmem:[%s427 + $0xe8] sm:$0xff]
      %v472 = vld [vmem:[%s427 + $0xf0] sm:$0xff]
      %v473 = vld [vmem:[%s427 + $0xf8] sm:$0xff]
      %v474 = vld [vmem:[%s433] sm:$0xff]
      %v475 = vld [vmem:[%s433 + $0x8] sm:$0xff]
      %v476 = vld [vmem:[%s433 + $0x10] sm:$0xff]
      %v477 = vld [vmem:[%s433 + $0x18] sm:$0xff]
      %v478 = vld [vmem:[%s433 + $0x20] sm:$0xff]
      %v479 = vld [vmem:[%s433 + $0x28] sm:$0xff]
      %v480 = vld [vmem:[%s433 + $0x30] sm:$0xff]
      %v481 = vld [vmem:[%s433 + $0x38] sm:$0xff]
      %v482 = vld [vmem:[%s433 + $0x40] sm:$0xff]
      %v483 = vld [vmem:[%s433 + $0x48] sm:$0xff]
      %v484 = vld [vmem:[%s433 + $0x50] sm:$0xff]
      %v485 = vld [vmem:[%s433 + $0x58] sm:$0xff]
      %v486 = vld [vmem:[%s433 + $0x60] sm:$0xff]
      %v487 = vld [vmem:[%s433 + $0x68] sm:$0xff]
      %v488 = vld [vmem:[%s433 + $0x70] sm:$0xff]
      %v489 = vld [vmem:[%s433 + $0x78] sm:$0xff]
      %v490 = vld [vmem:[%s433 + $0x80] sm:$0xff]
      %v491 = vld [vmem:[%s433 + $0x88] sm:$0xff]
      %v492 = vld [vmem:[%s433 + $0x90] sm:$0xff]
      %v493 = vld [vmem:[%s433 + $0x98] sm:$0xff]
      %v494 = vld [vmem:[%s433 + $0xa0] sm:$0xff]
      %v495 = vld [vmem:[%s433 + $0xa8] sm:$0xff]
      %v496 = vld [vmem:[%s433 + $0xb0] sm:$0xff]
      %v497 = vld [vmem:[%s433 + $0xb8] sm:$0xff]
      %v498 = vld [vmem:[%s433 + $0xc0] sm:$0xff]
      %v499 = vld [vmem:[%s433 + $0xc8] sm:$0xff]
      %v500 = vld [vmem:[%s433 + $0xd0] sm:$0xff]
      %v501 = vld [vmem:[%s433 + $0xd8] sm:$0xff]
      %v502 = vld [vmem:[%s433 + $0xe0] sm:$0xff]
      %v503 = vld [vmem:[%s433 + $0xe8] sm:$0xff]
      %v504 = vld [vmem:[%s433 + $0xf0] sm:$0xff]
      %v505 = vld [vmem:[%s433 + $0xf8] sm:$0xff]
      %v506 = vlaneseq
      %v507 = vand.u32 %v506, 127
      %508 = vset.pattern.permute.xlu0 0
      %509 = vperm.xlu0 %508, %v442
      %v510 = vpop.permute.xlu0 %509
      %511 = vset.pattern.permute.xlu0 0
      %512 = vperm.xlu0 %511, %v443
      %v513 = vpop.permute.xlu0 %512
      %514 = vset.pattern.permute.xlu0 0
      %515 = vperm.xlu0 %514, %v444
      %v516 = vpop.permute.xlu0 %515
      %517 = vset.pattern.permute.xlu0 0
      %518 = vperm.xlu0 %517, %v445
      %v519 = vpop.permute.xlu0 %518
      %520 = vset.pattern.permute.xlu0 0
      %521 = vperm.xlu0 %520, %v446
      %v522 = vpop.permute.xlu0 %521
      %523 = vset.pattern.permute.xlu0 0
      %524 = vperm.xlu0 %523, %v447
      %v525 = vpop.permute.xlu0 %524
      %526 = vset.pattern.permute.xlu0 0
      %527 = vperm.xlu0 %526, %v448
      %v528 = vpop.permute.xlu0 %527
      %529 = vset.pattern.permute.xlu0 0
      %530 = vperm.xlu0 %529, %v449
      %v531 = vpop.permute.xlu0 %530
      %532 = vset.pattern.permute.xlu0 0
      %533 = vperm.xlu0 %532, %v450
      %v534 = vpop.permute.xlu0 %533
      %535 = vset.pattern.permute.xlu0 0
      %536 = vperm.xlu0 %535, %v451
      %v537 = vpop.permute.xlu0 %536
      %538 = vset.pattern.permute.xlu0 0
      %539 = vperm.xlu0 %538, %v452
      %v540 = vpop.permute.xlu0 %539
      %541 = vset.pattern.permute.xlu0 0
      %542 = vperm.xlu0 %541, %v453
      %v543 = vpop.permute.xlu0 %542
      %544 = vset.pattern.permute.xlu0 0
      %545 = vperm.xlu0 %544, %v454
      %v546 = vpop.permute.xlu0 %545
      %547 = vset.pattern.permute.xlu0 0
      %548 = vperm.xlu0 %547, %v455
      %v549 = vpop.permute.xlu0 %548
      %550 = vset.pattern.permute.xlu0 0
      %551 = vperm.xlu0 %550, %v456
      %v552 = vpop.permute.xlu0 %551
      %553 = vset.pattern.permute.xlu0 0
      %554 = vperm.xlu0 %553, %v457
      %v555 = vpop.permute.xlu0 %554
      %556 = vset.pattern.permute.xlu0 0
      %557 = vperm.xlu0 %556, %v458
      %v558 = vpop.permute.xlu0 %557
      %559 = vset.pattern.permute.xlu0 0
      %560 = vperm.xlu0 %559, %v459
      %v561 = vpop.permute.xlu0 %560
      %562 = vset.pattern.permute.xlu0 0
      %563 = vperm.xlu0 %562, %v460
      %v564 = vpop.permute.xlu0 %563
      %565 = vset.pattern.permute.xlu0 0
      %566 = vperm.xlu0 %565, %v461
      %v567 = vpop.permute.xlu0 %566
      %568 = vset.pattern.permute.xlu0 0
      %569 = vperm.xlu0 %568, %v462
      %v570 = vpop.permute.xlu0 %569
      %571 = vset.pattern.permute.xlu0 0
      %572 = vperm.xlu0 %571, %v463
      %v573 = vpop.permute.xlu0 %572
      %574 = vset.pattern.permute.xlu0 0
      %575 = vperm.xlu0 %574, %v464
      %v576 = vpop.permute.xlu0 %575
      %577 = vset.pattern.permute.xlu0 0
      %578 = vperm.xlu0 %577, %v465
      %v579 = vpop.permute.xlu0 %578
      %580 = vset.pattern.permute.xlu0 0
      %581 = vperm.xlu0 %580, %v466
      %v582 = vpop.permute.xlu0 %581
      %583 = vset.pattern.permute.xlu0 0
      %584 = vperm.xlu0 %583, %v467
      %v585 = vpop.permute.xlu0 %584
      %586 = vset.pattern.permute.xlu0 0
      %587 = vperm.xlu0 %586, %v468
      %v588 = vpop.permute.xlu0 %587
      %589 = vset.pattern.permute.xlu0 0
      %590 = vperm.xlu0 %589, %v469
      %v591 = vpop.permute.xlu0 %590
      %592 = vset.pattern.permute.xlu0 0
      %593 = vperm.xlu0 %592, %v470
      %v594 = vpop.permute.xlu0 %593
      %595 = vset.pattern.permute.xlu0 0
      %596 = vperm.xlu0 %595, %v471
      %v597 = vpop.permute.xlu0 %596
      %598 = vset.pattern.permute.xlu0 0
      %599 = vperm.xlu0 %598, %v472
      %v600 = vpop.permute.xlu0 %599
      %601 = vset.pattern.permute.xlu0 0
      %602 = vperm.xlu0 %601, %v473
      %v603 = vpop.permute.xlu0 %602
      %vm604 = vcmp.eq.s32.totalorder %v507, %v510
      %vm605 = vcmp.eq.s32.totalorder %v507, %v513
      %vm606 = vcmp.eq.s32.totalorder %v507, %v516
      %vm607 = vcmp.eq.s32.totalorder %v507, %v519
      %vm608 = vcmp.eq.s32.totalorder %v507, %v522
      %vm609 = vcmp.eq.s32.totalorder %v507, %v525
      %vm610 = vcmp.eq.s32.totalorder %v507, %v528
      %vm611 = vcmp.eq.s32.totalorder %v507, %v531
      %vm612 = vcmp.eq.s32.totalorder %v507, %v534
      %vm613 = vcmp.eq.s32.totalorder %v507, %v537
      %vm614 = vcmp.eq.s32.totalorder %v507, %v540
      %vm615 = vcmp.eq.s32.totalorder %v507, %v543
      %vm616 = vcmp.eq.s32.totalorder %v507, %v546
      %vm617 = vcmp.eq.s32.totalorder %v507, %v549
      %vm618 = vcmp.eq.s32.totalorder %v507, %v552
      %vm619 = vcmp.eq.s32.totalorder %v507, %v555
      %vm620 = vcmp.eq.s32.totalorder %v507, %v558
      %vm621 = vcmp.eq.s32.totalorder %v507, %v561
      %vm622 = vcmp.eq.s32.totalorder %v507, %v564
      %vm623 = vcmp.eq.s32.totalorder %v507, %v567
      %vm624 = vcmp.eq.s32.totalorder %v507, %v570
      %vm625 = vcmp.eq.s32.totalorder %v507, %v573
      %vm626 = vcmp.eq.s32.totalorder %v507, %v576
      %vm627 = vcmp.eq.s32.totalorder %v507, %v579
      %vm628 = vcmp.eq.s32.totalorder %v507, %v582
      %vm629 = vcmp.eq.s32.totalorder %v507, %v585
      %vm630 = vcmp.eq.s32.totalorder %v507, %v588
      %vm631 = vcmp.eq.s32.totalorder %v507, %v591
      %vm632 = vcmp.eq.s32.totalorder %v507, %v594
      %vm633 = vcmp.eq.s32.totalorder %v507, %v597
      %vm634 = vcmp.eq.s32.totalorder %v507, %v600
      %vm635 = vcmp.eq.s32.totalorder %v507, %v603
      %v636 = vsel %vm604, 1.0, 0.0
      %v637 = vsel %vm605, 1.0, 0.0
      %v638 = vsel %vm606, 1.0, 0.0
      %v639 = vsel %vm607, 1.0, 0.0
      %v640 = vsel %vm608, 1.0, 0.0
      %v641 = vsel %vm609, 1.0, 0.0
      %v642 = vsel %vm610, 1.0, 0.0
      %v643 = vsel %vm611, 1.0, 0.0
      %v644 = vsel %vm612, 1.0, 0.0
      %v645 = vsel %vm613, 1.0, 0.0
      %v646 = vsel %vm614, 1.0, 0.0
      %v647 = vsel %vm615, 1.0, 0.0
      %v648 = vsel %vm616, 1.0, 0.0
      %v649 = vsel %vm617, 1.0, 0.0
      %v650 = vsel %vm618, 1.0, 0.0
      %v651 = vsel %vm619, 1.0, 0.0
      %v652 = vsel %vm620, 1.0, 0.0
      %v653 = vsel %vm621, 1.0, 0.0
      %v654 = vsel %vm622, 1.0, 0.0
      %v655 = vsel %vm623, 1.0, 0.0
      %v656 = vsel %vm624, 1.0, 0.0
      %v657 = vsel %vm625, 1.0, 0.0
      %v658 = vsel %vm626, 1.0, 0.0
      %v659 = vsel %vm627, 1.0, 0.0
      %v660 = vsel %vm628, 1.0, 0.0
      %v661 = vsel %vm629, 1.0, 0.0
      %v662 = vsel %vm630, 1.0, 0.0
      %v663 = vsel %vm631, 1.0, 0.0
      %v664 = vsel %vm632, 1.0, 0.0
      %v665 = vsel %vm633, 1.0, 0.0
      %v666 = vsel %vm634, 1.0, 0.0
      %v667 = vsel %vm635, 1.0, 0.0
      %668 = vset.pattern.permute.xlu0 0
      %669 = vperm.xlu0 %668, %v474
      %v670 = vpop.permute.xlu0 %669
      %671 = vset.pattern.permute.xlu0 0
      %672 = vperm.xlu0 %671, %v475
      %v673 = vpop.permute.xlu0 %672
      %674 = vset.pattern.permute.xlu0 0
      %675 = vperm.xlu0 %674, %v476
      %v676 = vpop.permute.xlu0 %675
      %677 = vset.pattern.permute.xlu0 0
      %678 = vperm.xlu0 %677, %v477
      %v679 = vpop.permute.xlu0 %678
      %680 = vset.pattern.permute.xlu0 0
      %681 = vperm.xlu0 %680, %v478
      %v682 = vpop.permute.xlu0 %681
      %683 = vset.pattern.permute.xlu0 0
      %684 = vperm.xlu0 %683, %v479
      %v685 = vpop.permute.xlu0 %684
      %686 = vset.pattern.permute.xlu0 0
      %687 = vperm.xlu0 %686, %v480
      %v688 = vpop.permute.xlu0 %687
      %689 = vset.pattern.permute.xlu0 0
      %690 = vperm.xlu0 %689, %v481
      %v691 = vpop.permute.xlu0 %690
      %692 = vset.pattern.permute.xlu0 0
      %693 = vperm.xlu0 %692, %v482
      %v694 = vpop.permute.xlu0 %693
      %695 = vset.pattern.permute.xlu0 0
      %696 = vperm.xlu0 %695, %v483
      %v697 = vpop.permute.xlu0 %696
      %698 = vset.pattern.permute.xlu0 0
      %699 = vperm.xlu0 %698, %v484
      %v700 = vpop.permute.xlu0 %699
      %701 = vset.pattern.permute.xlu0 0
      %702 = vperm.xlu0 %701, %v485
      %v703 = vpop.permute.xlu0 %702
      %704 = vset.pattern.permute.xlu0 0
      %705 = vperm.xlu0 %704, %v486
      %v706 = vpop.permute.xlu0 %705
      %707 = vset.pattern.permute.xlu0 0
      %708 = vperm.xlu0 %707, %v487
      %v709 = vpop.permute.xlu0 %708
      %710 = vset.pattern.permute.xlu0 0
      %711 = vperm.xlu0 %710, %v488
      %v712 = vpop.permute.xlu0 %711
      %713 = vset.pattern.permute.xlu0 0
      %714 = vperm.xlu0 %713, %v489
      %v715 = vpop.permute.xlu0 %714
      %716 = vset.pattern.permute.xlu0 0
      %717 = vperm.xlu0 %716, %v490
      %v718 = vpop.permute.xlu0 %717
      %719 = vset.pattern.permute.xlu0 0
      %720 = vperm.xlu0 %719, %v491
      %v721 = vpop.permute.xlu0 %720
      %722 = vset.pattern.permute.xlu0 0
      %723 = vperm.xlu0 %722, %v492
      %v724 = vpop.permute.xlu0 %723
      %725 = vset.pattern.permute.xlu0 0
      %726 = vperm.xlu0 %725, %v493
      %v727 = vpop.permute.xlu0 %726
      %728 = vset.pattern.permute.xlu0 0
      %729 = vperm.xlu0 %728, %v494
      %v730 = vpop.permute.xlu0 %729
      %731 = vset.pattern.permute.xlu0 0
      %732 = vperm.xlu0 %731, %v495
      %v733 = vpop.permute.xlu0 %732
      %734 = vset.pattern.permute.xlu0 0
      %735 = vperm.xlu0 %734, %v496
      %v736 = vpop.permute.xlu0 %735
      %737 = vset.pattern.permute.xlu0 0
      %738 = vperm.xlu0 %737, %v497
      %v739 = vpop.permute.xlu0 %738
      %740 = vset.pattern.permute.xlu0 0
      %741 = vperm.xlu0 %740, %v498
      %v742 = vpop.permute.xlu0 %741
      %743 = vset.pattern.permute.xlu0 0
      %744 = vperm.xlu0 %743, %v499
      %v745 = vpop.permute.xlu0 %744
      %746 = vset.pattern.permute.xlu0 0
      %747 = vperm.xlu0 %746, %v500
      %v748 = vpop.permute.xlu0 %747
      %749 = vset.pattern.permute.xlu0 0
      %750 = vperm.xlu0 %749, %v501
      %v751 = vpop.permute.xlu0 %750
      %752 = vset.pattern.permute.xlu0 0
      %753 = vperm.xlu0 %752, %v502
      %v754 = vpop.permute.xlu0 %753
      %755 = vset.pattern.permute.xlu0 0
      %756 = vperm.xlu0 %755, %v503
      %v757 = vpop.permute.xlu0 %756
      %758 = vset.pattern.permute.xlu0 0
      %759 = vperm.xlu0 %758, %v504
      %v760 = vpop.permute.xlu0 %759
      %761 = vset.pattern.permute.xlu0 0
      %762 = vperm.xlu0 %761, %v505
      %v763 = vpop.permute.xlu0 %762
      %vm764 = vcmp.eq.s32.totalorder %v507, %v670
      %vm765 = vcmp.eq.s32.totalorder %v507, %v673
      %vm766 = vcmp.eq.s32.totalorder %v507, %v676
      %vm767 = vcmp.eq.s32.totalorder %v507, %v679
      %vm768 = vcmp.eq.s32.totalorder %v507, %v682
      %vm769 = vcmp.eq.s32.totalorder %v507, %v685
      %vm770 = vcmp.eq.s32.totalorder %v507, %v688
      %vm771 = vcmp.eq.s32.totalorder %v507, %v691
      %vm772 = vcmp.eq.s32.totalorder %v507, %v694
      %vm773 = vcmp.eq.s32.totalorder %v507, %v697
      %vm774 = vcmp.eq.s32.totalorder %v507, %v700
      %vm775 = vcmp.eq.s32.totalorder %v507, %v703
      %vm776 = vcmp.eq.s32.totalorder %v507, %v706
      %vm777 = vcmp.eq.s32.totalorder %v507, %v709
      %vm778 = vcmp.eq.s32.totalorder %v507, %v712
      %vm779 = vcmp.eq.s32.totalorder %v507, %v715
      %vm780 = vcmp.eq.s32.totalorder %v507, %v718
      %vm781 = vcmp.eq.s32.totalorder %v507, %v721
      %vm782 = vcmp.eq.s32.totalorder %v507, %v724
      %vm783 = vcmp.eq.s32.totalorder %v507, %v727
      %vm784 = vcmp.eq.s32.totalorder %v507, %v730
      %vm785 = vcmp.eq.s32.totalorder %v507, %v733
      %vm786 = vcmp.eq.s32.totalorder %v507, %v736
      %vm787 = vcmp.eq.s32.totalorder %v507, %v739
      %vm788 = vcmp.eq.s32.totalorder %v507, %v742
      %vm789 = vcmp.eq.s32.totalorder %v507, %v745
      %vm790 = vcmp.eq.s32.totalorder %v507, %v748
      %vm791 = vcmp.eq.s32.totalorder %v507, %v751
      %vm792 = vcmp.eq.s32.totalorder %v507, %v754
      %vm793 = vcmp.eq.s32.totalorder %v507, %v757
      %vm794 = vcmp.eq.s32.totalorder %v507, %v760
      %vm795 = vcmp.eq.s32.totalorder %v507, %v763
      %v796 = vsel %vm764, 1.0, 0.0
      %v797 = vsel %vm765, 1.0, 0.0
      %v798 = vsel %vm766, 1.0, 0.0
      %v799 = vsel %vm767, 1.0, 0.0
      %v800 = vsel %vm768, 1.0, 0.0
      %v801 = vsel %vm769, 1.0, 0.0
      %v802 = vsel %vm770, 1.0, 0.0
      %v803 = vsel %vm771, 1.0, 0.0
      %v804 = vsel %vm772, 1.0, 0.0
      %v805 = vsel %vm773, 1.0, 0.0
      %v806 = vsel %vm774, 1.0, 0.0
      %v807 = vsel %vm775, 1.0, 0.0
      %v808 = vsel %vm776, 1.0, 0.0
      %v809 = vsel %vm777, 1.0, 0.0
      %v810 = vsel %vm778, 1.0, 0.0
      %v811 = vsel %vm779, 1.0, 0.0
      %v812 = vsel %vm780, 1.0, 0.0
      %v813 = vsel %vm781, 1.0, 0.0
      %v814 = vsel %vm782, 1.0, 0.0
      %v815 = vsel %vm783, 1.0, 0.0
      %v816 = vsel %vm784, 1.0, 0.0
      %v817 = vsel %vm785, 1.0, 0.0
      %v818 = vsel %vm786, 1.0, 0.0
      %v819 = vsel %vm787, 1.0, 0.0
      %v820 = vsel %vm788, 1.0, 0.0
      %v821 = vsel %vm789, 1.0, 0.0
      %v822 = vsel %vm790, 1.0, 0.0
      %v823 = vsel %vm791, 1.0, 0.0
      %v824 = vsel %vm792, 1.0, 0.0
      %v825 = vsel %vm793, 1.0, 0.0
      %v826 = vsel %vm794, 1.0, 0.0
      %v827 = vsel %vm795, 1.0, 0.0
      %v828 = vld [vmem:[%s2] sm:$0xff]
      %v829 = vld [vmem:[%s2 + $0x8] sm:$0xff]
      %v830 = vld [vmem:[%s2 + $0x10] sm:$0xff]
      %v831 = vld [vmem:[%s2 + $0x18] sm:$0xff]
      %v832 = vld [vmem:[%s2 + $0x20] sm:$0xff]
      %v833 = vld [vmem:[%s2 + $0x28] sm:$0xff]
      %v834 = vld [vmem:[%s2 + $0x30] sm:$0x7]
      %vm835 = vcmask 416768
      %v837 = vsel %vm835, %v636, 0
      %v840 = vsel %vm835, %v637, 0
      %v843 = vsel %vm835, %v638, 0
      %v846 = vsel %vm835, %v639, 0
      %v849 = vsel %vm835, %v640, 0
      %v852 = vsel %vm835, %v641, 0
      %v855 = vsel %vm835, %v642, 0
      %v858 = vsel %vm835, %v643, 0
      %v861 = vsel %vm835, %v644, 0
      %v864 = vsel %vm835, %v645, 0
      %v867 = vsel %vm835, %v646, 0
      %v870 = vsel %vm835, %v647, 0
      %v873 = vsel %vm835, %v648, 0
      %v876 = vsel %vm835, %v649, 0
      %v879 = vsel %vm835, %v650, 0
      %v882 = vsel %vm835, %v651, 0
      %v885 = vsel %vm835, %v652, 0
      %v888 = vsel %vm835, %v653, 0
      %v891 = vsel %vm835, %v654, 0
      %v894 = vsel %vm835, %v655, 0
      %v897 = vsel %vm835, %v656, 0
      %v900 = vsel %vm835, %v657, 0
      %v903 = vsel %vm835, %v658, 0
      %v906 = vsel %vm835, %v659, 0
      %v909 = vsel %vm835, %v660, 0
      %v912 = vsel %vm835, %v661, 0
      %v915 = vsel %vm835, %v662, 0
      %v918 = vsel %vm835, %v663, 0
      %v921 = vsel %vm835, %v664, 0
      %v924 = vsel %vm835, %v665, 0
      %v927 = vsel %vm835, %v666, 0
      %v930 = vsel %vm835, %v667, 0
      %vm932 = vcmask 1042432
      %v934 = vsel %vm932, %v834, 0
      %936 = vmatprep.subr.mxu0 0.0
      %937 = vmatpush1.msra.mxu0 %v828
      %938 = vmatprep.subr.mxu0 0.0
      %939 = vmatpush1.msra.mxu0 %v829
      %940 = vmatprep.subr.mxu0 0.0
      %941 = vmatpush1.msra.mxu0 %v830
      %942 = vmatprep.subr.mxu0 0.0
      %943 = vmatpush1.msra.mxu0 %v831
      %944 = vmatprep.subr.mxu0 0.0
      %945 = vmatpush1.msra.mxu0 %v832
      %946 = vmatprep.subr.mxu0 0.0
      %947 = vmatpush1.msra.mxu0 %v833
      %948 = vmatprep.subr.mxu0 0.0
      %949 = vmatpush1.msra.mxu0 %v934
      %950 = vmatprep.subr.mxu0 0.0
      %951 = vmatpush1.msra.mxu0 0.0
      %952 = vmatprep.subr.mxu0 0.0
      %953 = vmatpush1.msra.mxu0 0.0
      %954 = vmatprep.subr.mxu0 0.0
      %955 = vmatpush1.msra.mxu0 0.0
      %956 = vmatprep.subr.mxu0 0.0
      %957 = vmatpush1.msra.mxu0 0.0
      %958 = vmatprep.subr.mxu0 0.0
      %959 = vmatpush1.msra.mxu0 0.0
      %960 = vmatprep.subr.mxu0 0.0
      %961 = vmatpush1.msra.mxu0 0.0
      %962 = vmatprep.subr.mxu0 0.0
      %963 = vmatpush1.msra.mxu0 0.0
      %964 = vmatprep.subr.mxu0 0.0
      %965 = vmatpush1.msra.mxu0 0.0
      %966 = vmatprep.subr.mxu0 0.0
      %967 = vmatpush1.msra.mxu0 0.0
      %968 = vmatprep.subr.mxu0 0.0
      %969 = vmatpush1.msra.mxu0 0.0
      %970 = vmatprep.subr.mxu0 0.0
      %971 = vmatpush1.msra.mxu0 0.0
      %972 = vmatprep.subr.mxu0 0.0
      %973 = vmatpush1.msra.mxu0 0.0
      %974 = vmatprep.subr.mxu0 0.0
      %975 = vmatpush1.msra.mxu0 0.0
      %976 = vmatprep.subr.mxu0 0.0
      %977 = vmatpush1.msra.mxu0 0.0
      %978 = vmatprep.subr.mxu0 0.0
      %979 = vmatpush1.msra.mxu0 0.0
      %980 = vmatprep.subr.mxu0 0.0
      %981 = vmatpush1.msra.mxu0 0.0
      %982 = vmatprep.subr.mxu0 0.0
      %983 = vmatpush1.msra.mxu0 0.0
      %984 = vmatprep.subr.mxu0 0.0
      %985 = vmatpush1.msra.mxu0 0.0
      %986 = vmatprep.subr.mxu0 0.0
      %987 = vmatpush1.msra.mxu0 0.0
      %988 = vmatprep.subr.mxu0 0.0
      %989 = vmatpush1.msra.mxu0 0.0
      %990 = vmatprep.subr.mxu0 0.0
      %991 = vmatpush1.msra.mxu0 0.0
      %992 = vmatprep.subr.mxu0 0.0
      %993 = vmatpush1.msra.mxu0 0.0
      %994 = vmatprep.subr.mxu0 0.0
      %995 = vmatpush1.msra.mxu0 0.0
      %996 = vmatprep.subr.mxu0 0.0
      %997 = vmatpush1.msra.mxu0 0.0
      %998 = vmatprep.subr.mxu0 0.0
      %999 = vmatpush1.msra.mxu0 0.0
      %1000 = vmatprep.mubr.f32.mxu0 0.0
      %1001 = vmatmul.mubr.f32.gmra.mrb[0].mxu0 %v837
      %v1002 = vpop.f32.mrb[0].mxu0
      %v1003 = vadd.f32 0.0, %v1002
      %v1004 = vpop.f32.mrb[0].mxu0
      %1005 = vmatprep.mubr.f32.mxu0 0.0
      %1006 = vmatmul.mubr.f32.gmra.mrb[0].mxu0 %v840
      %v1007 = vpop.f32.mrb[0].mxu0
      %v1008 = vadd.f32 0.0, %v1007
      %v1009 = vpop.f32.mrb[0].mxu0
      %1010 = vmatprep.mubr.f32.mxu0 0.0
      %1011 = vmatmul.mubr.f32.gmra.mrb[0].mxu0 %v843
      %v1012 = vpop.f32.mrb[0].mxu0
      %v1013 = vadd.f32 0.0, %v1012
      %v1014 = vpop.f32.mrb[0].mxu0
      %1015 = vmatprep.mubr.f32.mxu0 0.0
      %1016 = vmatmul.mubr.f32.gmra.mrb[0].mxu0 %v846
      %v1017 = vpop.f32.mrb[0].mxu0
      %v1018 = vadd.f32 0.0, %v1017
      %v1019 = vpop.f32.mrb[0].mxu0
      %1020 = vmatprep.mubr.f32.mxu0 0.0
      %1021 = vmatmul.mubr.f32.gmra.mrb[0].mxu0 %v849
      %v1022 = vpop.f32.mrb[0].mxu0
      %v1023 = vadd.f32 0.0, %v1022
      %v1024 = vpop.f32.mrb[0].mxu0
      %1025 = vmatprep.mubr.f32.mxu0 0.0
      %1026 = vmatmul.mubr.f32.gmra.mrb[0].mxu0 %v852
      %v1027 = vpop.f32.mrb[0].mxu0
      %v1028 = vadd.f32 0.0, %v1027
      %v1029 = vpop.f32.mrb[0].mxu0
      %1030 = vmatprep.mubr.f32.mxu0 0.0
      %1031 = vmatmul.mubr.f32.gmra.mrb[0].mxu0 %v855
      %v1032 = vpop.f32.mrb[0].mxu0
      %v1033 = vadd.f32 0.0, %v1032
      %v1034 = vpop.f32.mrb[0].mxu0
      %1035 = vmatprep.mubr.f32.mxu0 0.0
      %1036 = vmatmul.mubr.f32.gmra.mrb[0].mxu0 %v858
      %v1037 = vpop.f32.mrb[0].mxu0
      %v1038 = vadd.f32 0.0, %v1037
      %v1039 = vpop.f32.mrb[0].mxu0
      %1040 = vmatprep.mubr.f32.mxu0 0.0
      %1041 = vmatmul.mubr.f32.gmra.mrb[0].mxu0 %v861
      %v1042 = vpop.f32.mrb[0].mxu0
      %v1043 = vadd.f32 0.0, %v1042
      %v1044 = vpop.f32.mrb[0].mxu0
      %1045 = vmatprep.mubr.f32.mxu0 0.0
      %1046 = vmatmul.mubr.f32.gmra.mrb[0].mxu0 %v864
      %v1047 = vpop.f32.mrb[0].mxu0
      %v1048 = vadd.f32 0.0, %v1047
      %v1049 = vpop.f32.mrb[0].mxu0
      %1050 = vmatprep.mubr.f32.mxu0 0.0
      %1051 = vmatmul.mubr.f32.gmra.mrb[0].mxu0 %v867
      %v1052 = vpop.f32.mrb[0].mxu0
      %v1053 = vadd.f32 0.0, %v1052
      %v1054 = vpop.f32.mrb[0].mxu0
      %1055 = vmatprep.mubr.f32.mxu0 0.0
      %1056 = vmatmul.mubr.f32.gmra.mrb[0].mxu0 %v870
      %v1057 = vpop.f32.mrb[0].mxu0
      %v1058 = vadd.f32 0.0, %v1057
      %v1059 = vpop.f32.mrb[0].mxu0
      %1060 = vmatprep.mubr.f32.mxu0 0.0
      %1061 = vmatmul.mubr.f32.gmra.mrb[0].mxu0 %v873
      %v1062 = vpop.f32.mrb[0].mxu0
      %v1063 = vadd.f32 0.0, %v1062
      %v1064 = vpop.f32.mrb[0].mxu0
      %1065 = vmatprep.mubr.f32.mxu0 0.0
      %1066 = vmatmul.mubr.f32.gmra.mrb[0].mxu0 %v876
      %v1067 = vpop.f32.mrb[0].mxu0
      %v1068 = vadd.f32 0.0, %v1067
      %v1069 = vpop.f32.mrb[0].mxu0
      %1070 = vmatprep.mubr.f32.mxu0 0.0
      %1071 = vmatmul.mubr.f32.gmra.mrb[0].mxu0 %v879
      %v1072 = vpop.f32.mrb[0].mxu0
      %v1073 = vadd.f32 0.0, %v1072
      %v1074 = vpop.f32.mrb[0].mxu0
      %1075 = vmatprep.mubr.f32.mxu0 0.0
      %1076 = vmatmul.mubr.f32.gmra.mrb[0].mxu0 %v882
      %v1077 = vpop.f32.mrb[0].mxu0
      %v1078 = vadd.f32 0.0, %v1077
      %v1079 = vpop.f32.mrb[0].mxu0
      %1080 = vmatprep.mubr.f32.mxu0 0.0
      %1081 = vmatmul.mubr.f32.gmra.mrb[0].mxu0 %v885
      %v1082 = vpop.f32.mrb[0].mxu0
      %v1083 = vadd.f32 0.0, %v1082
      %v1084 = vpop.f32.mrb[0].mxu0
      %1085 = vmatprep.mubr.f32.mxu0 0.0
      %1086 = vmatmul.mubr.f32.gmra.mrb[0].mxu0 %v888
      %v1087 = vpop.f32.mrb[0].mxu0
      %v1088 = vadd.f32 0.0, %v1087
      %v1089 = vpop.f32.mrb[0].mxu0
      %1090 = vmatprep.mubr.f32.mxu0 0.0
      %1091 = vmatmul.mubr.f32.gmra.mrb[0].mxu0 %v891
      %v1092 = vpop.f32.mrb[0].mxu0
      %v1093 = vadd.f32 0.0, %v1092
      %v1094 = vpop.f32.mrb[0].mxu0
      %1095 = vmatprep.mubr.f32.mxu0 0.0
      %1096 = vmatmul.mubr.f32.gmra.mrb[0].mxu0 %v894
      %v1097 = vpop.f32.mrb[0].mxu0
      %v1098 = vadd.f32 0.0, %v1097
      %v1099 = vpop.f32.mrb[0].mxu0
      %1100 = vmatprep.mubr.f32.mxu0 0.0
      %1101 = vmatmul.mubr.f32.gmra.mrb[0].mxu0 %v897
      %v1102 = vpop.f32.mrb[0].mxu0
      %v1103 = vadd.f32 0.0, %v1102
      %v1104 = vpop.f32.mrb[0].mxu0
      %1105 = vmatprep.mubr.f32.mxu0 0.0
      %1106 = vmatmul.mubr.f32.gmra.mrb[0].mxu0 %v900
      %v1107 = vpop.f32.mrb[0].mxu0
      %v1108 = vadd.f32 0.0, %v1107
      %v1109 = vpop.f32.mrb[0].mxu0
      %1110 = vmatprep.mubr.f32.mxu0 0.0
      %1111 = vmatmul.mubr.f32.gmra.mrb[0].mxu0 %v903
      %v1112 = vpop.f32.mrb[0].mxu0
      %v1113 = vadd.f32 0.0, %v1112
      %v1114 = vpop.f32.mrb[0].mxu0
      %1115 = vmatprep.mubr.f32.mxu0 0.0
      %1116 = vmatmul.mubr.f32.gmra.mrb[0].mxu0 %v906
      %v1117 = vpop.f32.mrb[0].mxu0
      %v1118 = vadd.f32 0.0, %v1117
      %v1119 = vpop.f32.mrb[0].mxu0
      %1120 = vmatprep.mubr.f32.mxu0 0.0
      %1121 = vmatmul.mubr.f32.gmra.mrb[0].mxu0 %v909
      %v1122 = vpop.f32.mrb[0].mxu0
      %v1123 = vadd.f32 0.0, %v1122
      %v1124 = vpop.f32.mrb[0].mxu0
      %1125 = vmatprep.mubr.f32.mxu0 0.0
      %1126 = vmatmul.mubr.f32.gmra.mrb[0].mxu0 %v912
      %v1127 = vpop.f32.mrb[0].mxu0
      %v1128 = vadd.f32 0.0, %v1127
      %v1129 = vpop.f32.mrb[0].mxu0
      %1130 = vmatprep.mubr.f32.mxu0 0.0
      %1131 = vmatmul.mubr.f32.gmra.mrb[0].mxu0 %v915
      %v1132 = vpop.f32.mrb[0].mxu0
      %v1133 = vadd.f32 0.0, %v1132
      %v1134 = vpop.f32.mrb[0].mxu0
      %1135 = vmatprep.mubr.f32.mxu0 0.0
      %1136 = vmatmul.mubr.f32.gmra.mrb[0].mxu0 %v918
      %v1137 = vpop.f32.mrb[0].mxu0
      %v1138 = vadd.f32 0.0, %v1137
      %v1139 = vpop.f32.mrb[0].mxu0
      %1140 = vmatprep.mubr.f32.mxu0 0.0
      %1141 = vmatmul.mubr.f32.gmra.mrb[0].mxu0 %v921
      %v1142 = vpop.f32.mrb[0].mxu0
      %v1143 = vadd.f32 0.0, %v1142
      %v1144 = vpop.f32.mrb[0].mxu0
      %1145 = vmatprep.mubr.f32.mxu0 0.0
      %1146 = vmatmul.mubr.f32.gmra.mrb[0].mxu0 %v924
      %v1147 = vpop.f32.mrb[0].mxu0
      %v1148 = vadd.f32 0.0, %v1147
      %v1149 = vpop.f32.mrb[0].mxu0
      %1150 = vmatprep.mubr.f32.mxu0 0.0
      %1151 = vmatmul.mubr.f32.gmra.mrb[0].mxu0 %v927
      %v1152 = vpop.f32.mrb[0].mxu0
      %v1153 = vadd.f32 0.0, %v1152
      %v1154 = vpop.f32.mrb[0].mxu0
      %1155 = vmatprep.mubr.f32.mxu0 0.0
      %1156 = vmatmul.mubr.f32.gmra.mrb[0].mxu0 %v930
      %v1157 = vpop.f32.mrb[0].mxu0
      %v1158 = vadd.f32 0.0, %v1157
      %v1159 = vpop.f32.mrb[0].mxu0
      %1160 = vdwg.mxu0
      %v1161 = vld [vmem:[%s3] sm:$0xff]
      %v1162 = vld [vmem:[%s3 + $0x8] sm:$0xff]
      %v1163 = vld [vmem:[%s3 + $0x10] sm:$0xff]
      %v1164 = vld [vmem:[%s3 + $0x18] sm:$0xff]
      %v1165 = vld [vmem:[%s3 + $0x20] sm:$0xff]
      %v1166 = vld [vmem:[%s3 + $0x28] sm:$0x1]
      %vm1167 = vcmask 334848
      %v1169 = vsel %vm1167, %v796, 0
      %v1172 = vsel %vm1167, %v797, 0
      %v1175 = vsel %vm1167, %v798, 0
      %v1178 = vsel %vm1167, %v799, 0
      %v1181 = vsel %vm1167, %v800, 0
      %v1184 = vsel %vm1167, %v801, 0
      %v1187 = vsel %vm1167, %v802, 0
      %v1190 = vsel %vm1167, %v803, 0
      %v1193 = vsel %vm1167, %v804, 0
      %v1196 = vsel %vm1167, %v805, 0
      %v1199 = vsel %vm1167, %v806, 0
      %v1202 = vsel %vm1167, %v807, 0
      %v1205 = vsel %vm1167, %v808, 0
      %v1208 = vsel %vm1167, %v809, 0
      %v1211 = vsel %vm1167, %v810, 0
      %v1214 = vsel %vm1167, %v811, 0
      %v1217 = vsel %vm1167, %v812, 0
      %v1220 = vsel %vm1167, %v813, 0
      %v1223 = vsel %vm1167, %v814, 0
      %v1226 = vsel %vm1167, %v815, 0
      %v1229 = vsel %vm1167, %v816, 0
      %v1232 = vsel %vm1167, %v817, 0
      %v1235 = vsel %vm1167, %v818, 0
      %v1238 = vsel %vm1167, %v819, 0
      %v1241 = vsel %vm1167, %v820, 0
      %v1244 = vsel %vm1167, %v821, 0
      %v1247 = vsel %vm1167, %v822, 0
      %v1250 = vsel %vm1167, %v823, 0
      %v1253 = vsel %vm1167, %v824, 0
      %v1256 = vsel %vm1167, %v825, 0
      %v1259 = vsel %vm1167, %v826, 0
      %v1262 = vsel %vm1167, %v827, 0
      %vm1264 = vcmask 1040384
      %v1266 = vsel %vm1264, %v1166, 0
      %1268 = vmatprep.subr.mxu0 0.0
      %1269 = vmatpush1.msra.mxu0 %v1161
      %1270 = vmatprep.subr.mxu0 0.0
      %1271 = vmatpush1.msra.mxu0 %v1162
      %1272 = vmatprep.subr.mxu0 0.0
      %1273 = vmatpush1.msra.mxu0 %v1163
      %1274 = vmatprep.subr.mxu0 0.0
      %1275 = vmatpush1.msra.mxu0 %v1164
      %1276 = vmatprep.subr.mxu0 0.0
      %1277 = vmatpush1.msra.mxu0 %v1165
      %1278 = vmatprep.subr.mxu0 0.0
      %1279 = vmatpush1.msra.mxu0 %v1266
      %1280 = vmatprep.subr.mxu0 0.0
      %1281 = vmatpush1.msra.mxu0 0.0
      %1282 = vmatprep.subr.mxu0 0.0
      %1283 = vmatpush1.msra.mxu0 0.0
      %1284 = vmatprep.subr.mxu0 0.0
      %1285 = vmatpush1.msra.mxu0 0.0
      %1286 = vmatprep.subr.mxu0 0.0
      %1287 = vmatpush1.msra.mxu0 0.0
      %1288 = vmatprep.subr.mxu0 0.0
      %1289 = vmatpush1.msra.mxu0 0.0
      %1290 = vmatprep.subr.mxu0 0.0
      %1291 = vmatpush1.msra.mxu0 0.0
      %1292 = vmatprep.subr.mxu0 0.0
      %1293 = vmatpush1.msra.mxu0 0.0
      %1294 = vmatprep.subr.mxu0 0.0
      %1295 = vmatpush1.msra.mxu0 0.0
      %1296 = vmatprep.subr.mxu0 0.0
      %1297 = vmatpush1.msra.mxu0 0.0
      %1298 = vmatprep.subr.mxu0 0.0
      %1299 = vmatpush1.msra.mxu0 0.0
      %1300 = vmatprep.subr.mxu0 0.0
      %1301 = vmatpush1.msra.mxu0 0.0
      %1302 = vmatprep.subr.mxu0 0.0
      %1303 = vmatpush1.msra.mxu0 0.0
      %1304 = vmatprep.subr.mxu0 0.0
      %1305 = vmatpush1.msra.mxu0 0.0
      %1306 = vmatprep.subr.mxu0 0.0
      %1307 = vmatpush1.msra.mxu0 0.0
      %1308 = vmatprep.subr.mxu0 0.0
      %1309 = vmatpush1.msra.mxu0 0.0
      %1310 = vmatprep.subr.mxu0 0.0
      %1311 = vmatpush1.msra.mxu0 0.0
      %1312 = vmatprep.subr.mxu0 0.0
      %1313 = vmatpush1.msra.mxu0 0.0
      %1314 = vmatprep.subr.mxu0 0.0
      %1315 = vmatpush1.msra.mxu0 0.0
      %1316 = vmatprep.subr.mxu0 0.0
      %1317 = vmatpush1.msra.mxu0 0.0
      %1318 = vmatprep.subr.mxu0 0.0
      %1319 = vmatpush1.msra.mxu0 0.0
      %1320 = vmatprep.subr.mxu0 0.0
      %1321 = vmatpush1.msra.mxu0 0.0
      %1322 = vmatprep.subr.mxu0 0.0
      %1323 = vmatpush1.msra.mxu0 0.0
      %1324 = vmatprep.subr.mxu0 0.0
      %1325 = vmatpush1.msra.mxu0 0.0
      %1326 = vmatprep.subr.mxu0 0.0
      %1327 = vmatpush1.msra.mxu0 0.0
      %1328 = vmatprep.subr.mxu0 0.0
      %1329 = vmatpush1.msra.mxu0 0.0
      %1330 = vmatprep.subr.mxu0 0.0
      %1331 = vmatpush1.msra.mxu0 0.0
      %1332 = vmatprep.mubr.f32.mxu0 0.0
      %1333 = vmatmul.mubr.f32.gmra.mrb[0].mxu0 %v1169
      %v1334 = vpop.f32.mrb[0].mxu0
      %v1335 = vadd.f32 0.0, %v1334
      %v1336 = vpop.f32.mrb[0].mxu0
      %1337 = vmatprep.mubr.f32.mxu0 0.0
      %1338 = vmatmul.mubr.f32.gmra.mrb[0].mxu0 %v1172
      %v1339 = vpop.f32.mrb[0].mxu0
      %v1340 = vadd.f32 0.0, %v1339
      %v1341 = vpop.f32.mrb[0].mxu0
      %1342 = vmatprep.mubr.f32.mxu0 0.0
      %1343 = vmatmul.mubr.f32.gmra.mrb[0].mxu0 %v1175
      %v1344 = vpop.f32.mrb[0].mxu0
      %v1345 = vadd.f32 0.0, %v1344
      %v1346 = vpop.f32.mrb[0].mxu0
      %1347 = vmatprep.mubr.f32.mxu0 0.0
      %1348 = vmatmul.mubr.f32.gmra.mrb[0].mxu0 %v1178
      %v1349 = vpop.f32.mrb[0].mxu0
      %v1350 = vadd.f32 0.0, %v1349
      %v1351 = vpop.f32.mrb[0].mxu0
      %1352 = vmatprep.mubr.f32.mxu0 0.0
      %1353 = vmatmul.mubr.f32.gmra.mrb[0].mxu0 %v1181
      %v1354 = vpop.f32.mrb[0].mxu0
      %v1355 = vadd.f32 0.0, %v1354
      %v1356 = vpop.f32.mrb[0].mxu0
      %1357 = vmatprep.mubr.f32.mxu0 0.0
      %1358 = vmatmul.mubr.f32.gmra.mrb[0].mxu0 %v1184
      %v1359 = vpop.f32.mrb[0].mxu0
      %v1360 = vadd.f32 0.0, %v1359
      %v1361 = vpop.f32.mrb[0].mxu0
      %1362 = vmatprep.mubr.f32.mxu0 0.0
      %1363 = vmatmul.mubr.f32.gmra.mrb[0].mxu0 %v1187
      %v1364 = vpop.f32.mrb[0].mxu0
      %v1365 = vadd.f32 0.0, %v1364
      %v1366 = vpop.f32.mrb[0].mxu0
      %1367 = vmatprep.mubr.f32.mxu0 0.0
      %1368 = vmatmul.mubr.f32.gmra.mrb[0].mxu0 %v1190
      %v1369 = vpop.f32.mrb[0].mxu0
      %v1370 = vadd.f32 0.0, %v1369
      %v1371 = vpop.f32.mrb[0].mxu0
      %1372 = vmatprep.mubr.f32.mxu0 0.0
      %1373 = vmatmul.mubr.f32.gmra.mrb[0].mxu0 %v1193
      %v1374 = vpop.f32.mrb[0].mxu0
      %v1375 = vadd.f32 0.0, %v1374
      %v1376 = vpop.f32.mrb[0].mxu0
      %1377 = vmatprep.mubr.f32.mxu0 0.0
      %1378 = vmatmul.mubr.f32.gmra.mrb[0].mxu0 %v1196
      %v1379 = vpop.f32.mrb[0].mxu0
      %v1380 = vadd.f32 0.0, %v1379
      %v1381 = vpop.f32.mrb[0].mxu0
      %1382 = vmatprep.mubr.f32.mxu0 0.0
      %1383 = vmatmul.mubr.f32.gmra.mrb[0].mxu0 %v1199
      %v1384 = vpop.f32.mrb[0].mxu0
      %v1385 = vadd.f32 0.0, %v1384
      %v1386 = vpop.f32.mrb[0].mxu0
      %1387 = vmatprep.mubr.f32.mxu0 0.0
      %1388 = vmatmul.mubr.f32.gmra.mrb[0].mxu0 %v1202
      %v1389 = vpop.f32.mrb[0].mxu0
      %v1390 = vadd.f32 0.0, %v1389
      %v1391 = vpop.f32.mrb[0].mxu0
      %1392 = vmatprep.mubr.f32.mxu0 0.0
      %1393 = vmatmul.mubr.f32.gmra.mrb[0].mxu0 %v1205
      %v1394 = vpop.f32.mrb[0].mxu0
      %v1395 = vadd.f32 0.0, %v1394
      %v1396 = vpop.f32.mrb[0].mxu0
      %1397 = vmatprep.mubr.f32.mxu0 0.0
      %1398 = vmatmul.mubr.f32.gmra.mrb[0].mxu0 %v1208
      %v1399 = vpop.f32.mrb[0].mxu0
      %v1400 = vadd.f32 0.0, %v1399
      %v1401 = vpop.f32.mrb[0].mxu0
      %1402 = vmatprep.mubr.f32.mxu0 0.0
      %1403 = vmatmul.mubr.f32.gmra.mrb[0].mxu0 %v1211
      %v1404 = vpop.f32.mrb[0].mxu0
      %v1405 = vadd.f32 0.0, %v1404
      %v1406 = vpop.f32.mrb[0].mxu0
      %1407 = vmatprep.mubr.f32.mxu0 0.0
      %1408 = vmatmul.mubr.f32.gmra.mrb[0].mxu0 %v1214
      %v1409 = vpop.f32.mrb[0].mxu0
      %v1410 = vadd.f32 0.0, %v1409
      %v1411 = vpop.f32.mrb[0].mxu0
      %1412 = vmatprep.mubr.f32.mxu0 0.0
      %1413 = vmatmul.mubr.f32.gmra.mrb[0].mxu0 %v1217
      %v1414 = vpop.f32.mrb[0].mxu0
      %v1415 = vadd.f32 0.0, %v1414
      %v1416 = vpop.f32.mrb[0].mxu0
      %1417 = vmatprep.mubr.f32.mxu0 0.0
      %1418 = vmatmul.mubr.f32.gmra.mrb[0].mxu0 %v1220
      %v1419 = vpop.f32.mrb[0].mxu0
      %v1420 = vadd.f32 0.0, %v1419
      %v1421 = vpop.f32.mrb[0].mxu0
      %1422 = vmatprep.mubr.f32.mxu0 0.0
      %1423 = vmatmul.mubr.f32.gmra.mrb[0].mxu0 %v1223
      %v1424 = vpop.f32.mrb[0].mxu0
      %v1425 = vadd.f32 0.0, %v1424
      %v1426 = vpop.f32.mrb[0].mxu0
      %1427 = vmatprep.mubr.f32.mxu0 0.0
      %1428 = vmatmul.mubr.f32.gmra.mrb[0].mxu0 %v1226
      %v1429 = vpop.f32.mrb[0].mxu0
      %v1430 = vadd.f32 0.0, %v1429
      %v1431 = vpop.f32.mrb[0].mxu0
      %1432 = vmatprep.mubr.f32.mxu0 0.0
      %1433 = vmatmul.mubr.f32.gmra.mrb[0].mxu0 %v1229
      %v1434 = vpop.f32.mrb[0].mxu0
      %v1435 = vadd.f32 0.0, %v1434
      %v1436 = vpop.f32.mrb[0].mxu0
      %1437 = vmatprep.mubr.f32.mxu0 0.0
      %1438 = vmatmul.mubr.f32.gmra.mrb[0].mxu0 %v1232
      %v1439 = vpop.f32.mrb[0].mxu0
      %v1440 = vadd.f32 0.0, %v1439
      %v1441 = vpop.f32.mrb[0].mxu0
      %1442 = vmatprep.mubr.f32.mxu0 0.0
      %1443 = vmatmul.mubr.f32.gmra.mrb[0].mxu0 %v1235
      %v1444 = vpop.f32.mrb[0].mxu0
      %v1445 = vadd.f32 0.0, %v1444
      %v1446 = vpop.f32.mrb[0].mxu0
      %1447 = vmatprep.mubr.f32.mxu0 0.0
      %1448 = vmatmul.mubr.f32.gmra.mrb[0].mxu0 %v1238
      %v1449 = vpop.f32.mrb[0].mxu0
      %v1450 = vadd.f32 0.0, %v1449
      %v1451 = vpop.f32.mrb[0].mxu0
      %1452 = vmatprep.mubr.f32.mxu0 0.0
      %1453 = vmatmul.mubr.f32.gmra.mrb[0].mxu0 %v1241
      %v1454 = vpop.f32.mrb[0].mxu0
      %v1455 = vadd.f32 0.0, %v1454
      %v1456 = vpop.f32.mrb[0].mxu0
      %1457 = vmatprep.mubr.f32.mxu0 0.0
      %1458 = vmatmul.mubr.f32.gmra.mrb[0].mxu0 %v1244
      %v1459 = vpop.f32.mrb[0].mxu0
      %v1460 = vadd.f32 0.0, %v1459
      %v1461 = vpop.f32.mrb[0].mxu0
      %1462 = vmatprep.mubr.f32.mxu0 0.0
      %1463 = vmatmul.mubr.f32.gmra.mrb[0].mxu0 %v1247
      %v1464 = vpop.f32.mrb[0].mxu0
      %v1465 = vadd.f32 0.0, %v1464
      %v1466 = vpop.f32.mrb[0].mxu0
      %1467 = vmatprep.mubr.f32.mxu0 0.0
      %1468 = vmatmul.mubr.f32.gmra.mrb[0].mxu0 %v1250
      %v1469 = vpop.f32.mrb[0].mxu0
      %v1470 = vadd.f32 0.0, %v1469
      %v1471 = vpop.f32.mrb[0].mxu0
      %1472 = vmatprep.mubr.f32.mxu0 0.0
      %1473 = vmatmul.mubr.f32.gmra.mrb[0].mxu0 %v1253
      %v1474 = vpop.f32.mrb[0].mxu0
      %v1475 = vadd.f32 0.0, %v1474
      %v1476 = vpop.f32.mrb[0].mxu0
      %1477 = vmatprep.mubr.f32.mxu0 0.0
      %1478 = vmatmul.mubr.f32.gmra.mrb[0].mxu0 %v1256
      %v1479 = vpop.f32.mrb[0].mxu0
      %v1480 = vadd.f32 0.0, %v1479
      %v1481 = vpop.f32.mrb[0].mxu0
      %1482 = vmatprep.mubr.f32.mxu0 0.0
      %1483 = vmatmul.mubr.f32.gmra.mrb[0].mxu0 %v1259
      %v1484 = vpop.f32.mrb[0].mxu0
      %v1485 = vadd.f32 0.0, %v1484
      %v1486 = vpop.f32.mrb[0].mxu0
      %1487 = vmatprep.mubr.f32.mxu0 0.0
      %1488 = vmatmul.mubr.f32.gmra.mrb[0].mxu0 %v1262
      %v1489 = vpop.f32.mrb[0].mxu0
      %v1490 = vadd.f32 0.0, %v1489
      %v1491 = vpop.f32.mrb[0].mxu0
      %1492 = vdwg.mxu0
      %v1493 = vld [vmem:[%s5] sm:$0x1]
      %v1494 = vpack.c.bf16 %v1008, %v1003
      %v1495 = vpack.c.bf16 %v1018, %v1013
      %v1496 = vpack.c.bf16 %v1028, %v1023
      %v1497 = vpack.c.bf16 %v1038, %v1033
      %v1498 = vpack.c.bf16 %v1048, %v1043
      %v1499 = vpack.c.bf16 %v1058, %v1053
      %v1500 = vpack.c.bf16 %v1068, %v1063
      %v1501 = vpack.c.bf16 %v1078, %v1073
      %v1502 = vpack.c.bf16 %v1088, %v1083
      %v1503 = vpack.c.bf16 %v1098, %v1093
      %v1504 = vpack.c.bf16 %v1108, %v1103
      %v1505 = vpack.c.bf16 %v1118, %v1113
      %v1506 = vpack.c.bf16 %v1128, %v1123
      %v1507 = vpack.c.bf16 %v1138, %v1133
      %v1508 = vpack.c.bf16 %v1148, %v1143
      %v1509 = vpack.c.bf16 %v1158, %v1153
      %v1510 = vld [vmem:[%s4] sm:$0xf]
      %v1511 = vld [vmem:[%s4 + $0x4] sm:$0xf]
      %v1512 = vpack.c.bf16 %v1340, %v1335
      %v1513 = vpack.c.bf16 %v1350, %v1345
      %v1514 = vpack.c.bf16 %v1360, %v1355
      %v1515 = vpack.c.bf16 %v1370, %v1365
      %v1516 = vpack.c.bf16 %v1380, %v1375
      %v1517 = vpack.c.bf16 %v1390, %v1385
      %v1518 = vpack.c.bf16 %v1400, %v1395
      %v1519 = vpack.c.bf16 %v1410, %v1405
      %v1520 = vpack.c.bf16 %v1420, %v1415
      %v1521 = vpack.c.bf16 %v1430, %v1425
      %v1522 = vpack.c.bf16 %v1440, %v1435
      %v1523 = vpack.c.bf16 %v1450, %v1445
      %v1524 = vpack.c.bf16 %v1460, %v1455
      %v1525 = vpack.c.bf16 %v1470, %v1465
      %v1526 = vpack.c.bf16 %v1480, %v1475
      %v1527 = vpack.c.bf16 %v1490, %v1485
      %v1528 = vld [vmem:[%s4 + $0x8] sm:$0xf]
      %v1529 = vld [vmem:[%s4 + $0xc] sm:$0xf]
      %v1532 = vunpack.c.l.b16 %v1528
      %v1533 = vunpack.c.l.b16 %v1529
      %v1534 = vpack.c.b16 %v1533, %v1532
      %vm1536 = vcmask 130048
      %v1538 = vsel %vm1536, %v1512, 0
      %v1541 = vsel %vm1536, %v1513, 0
      %v1544 = vsel %vm1536, %v1514, 0
      %v1547 = vsel %vm1536, %v1515, 0
      %v1550 = vsel %vm1536, %v1516, 0
      %v1553 = vsel %vm1536, %v1517, 0
      %v1556 = vsel %vm1536, %v1518, 0
      %v1559 = vsel %vm1536, %v1519, 0
      %v1562 = vsel %vm1536, %v1520, 0
      %v1565 = vsel %vm1536, %v1521, 0
      %v1568 = vsel %vm1536, %v1522, 0
      %v1571 = vsel %vm1536, %v1523, 0
      %v1574 = vsel %vm1536, %v1524, 0
      %v1577 = vsel %vm1536, %v1525, 0
      %v1580 = vsel %vm1536, %v1526, 0
      %v1583 = vsel %vm1536, %v1527, 0
      %1585 = vmatprep.subr.bf16.mxu0 0
      %1586 = vmatpush1.bf16.msra.mxu0 %v1534
      %1587 = vmatprep.subr.bf16.mxu0 0
      %1588 = vmatpush1.bf16.msra.mxu0 0
      %1589 = vmatprep.subr.bf16.mxu0 0
      %1590 = vmatpush1.bf16.msra.mxu0 0
      %1591 = vmatprep.subr.bf16.mxu0 0
      %1592 = vmatpush1.bf16.msra.mxu0 0
      %1593 = vmatprep.subr.bf16.mxu0 0
      %1594 = vmatpush1.bf16.msra.mxu0 0
      %1595 = vmatprep.subr.bf16.mxu0 0
      %1596 = vmatpush1.bf16.msra.mxu0 0
      %1597 = vmatprep.subr.bf16.mxu0 0
      %1598 = vmatpush1.bf16.msra.mxu0 0
      %1599 = vmatprep.subr.bf16.mxu0 0
      %1600 = vmatpush1.bf16.msra.mxu0 0
      %1601 = vmatprep.subr.bf16.mxu0 0
      %1602 = vmatpush1.bf16.msra.mxu0 0
      %1603 = vmatprep.subr.bf16.mxu0 0
      %1604 = vmatpush1.bf16.msra.mxu0 0
      %1605 = vmatprep.subr.bf16.mxu0 0
      %1606 = vmatpush1.bf16.msra.mxu0 0
      %1607 = vmatprep.subr.bf16.mxu0 0
      %1608 = vmatpush1.bf16.msra.mxu0 0
      %1609 = vmatprep.subr.bf16.mxu0 0
      %1610 = vmatpush1.bf16.msra.mxu0 0
      %1611 = vmatprep.subr.bf16.mxu0 0
      %1612 = vmatpush1.bf16.msra.mxu0 0
      %1613 = vmatprep.subr.bf16.mxu0 0
      %1614 = vmatpush1.bf16.msra.mxu0 0
      %1615 = vmatprep.subr.bf16.mxu0 0
      %1616 = vmatpush1.bf16.msra.mxu0 0
      %1617 = vmatprep.mubr.bf16.mxu0 0
      %1618 = vmatmul.mubr.bf16.gmra.mrb[0].mxu0 %v1538
      %v1619 = vpop.f32.mrb[0].mxu0
      %v1620 = vadd.f32 0.0, %v1619
      %v1621 = vpop.f32.mrb[0].mxu0
      %v1622 = vpop.f32.mrb[0].mxu0
      %v1623 = vadd.f32 0.0, %v1622
      %v1624 = vpop.f32.mrb[0].mxu0
      %1625 = vmatprep.mubr.bf16.mxu0 0
      %1626 = vmatmul.mubr.bf16.gmra.mrb[0].mxu0 %v1541
      %v1627 = vpop.f32.mrb[0].mxu0
      %v1628 = vadd.f32 0.0, %v1627
      %v1629 = vpop.f32.mrb[0].mxu0
      %v1630 = vpop.f32.mrb[0].mxu0
      %v1631 = vadd.f32 0.0, %v1630
      %v1632 = vpop.f32.mrb[0].mxu0
      %1633 = vmatprep.mubr.bf16.mxu0 0
      %1634 = vmatmul.mubr.bf16.gmra.mrb[0].mxu0 %v1544
      %v1635 = vpop.f32.mrb[0].mxu0
      %v1636 = vadd.f32 0.0, %v1635
      %v1637 = vpop.f32.mrb[0].mxu0
      %v1638 = vpop.f32.mrb[0].mxu0
      %v1639 = vadd.f32 0.0, %v1638
      %v1640 = vpop.f32.mrb[0].mxu0
      %1641 = vmatprep.mubr.bf16.mxu0 0
      %1642 = vmatmul.mubr.bf16.gmra.mrb[0].mxu0 %v1547
      %v1643 = vpop.f32.mrb[0].mxu0
      %v1644 = vadd.f32 0.0, %v1643
      %v1645 = vpop.f32.mrb[0].mxu0
      %v1646 = vpop.f32.mrb[0].mxu0
      %v1647 = vadd.f32 0.0, %v1646
      %v1648 = vpop.f32.mrb[0].mxu0
      %1649 = vmatprep.mubr.bf16.mxu0 0
      %1650 = vmatmul.mubr.bf16.gmra.mrb[0].mxu0 %v1550
      %v1651 = vpop.f32.mrb[0].mxu0
      %v1652 = vadd.f32 0.0, %v1651
      %v1653 = vpop.f32.mrb[0].mxu0
      %v1654 = vpop.f32.mrb[0].mxu0
      %v1655 = vadd.f32 0.0, %v1654
      %v1656 = vpop.f32.mrb[0].mxu0
      %1657 = vmatprep.mubr.bf16.mxu0 0
      %1658 = vmatmul.mubr.bf16.gmra.mrb[0].mxu0 %v1553
      %v1659 = vpop.f32.mrb[0].mxu0
      %v1660 = vadd.f32 0.0, %v1659
      %v1661 = vpop.f32.mrb[0].mxu0
      %v1662 = vpop.f32.mrb[0].mxu0
      %v1663 = vadd.f32 0.0, %v1662
      %v1664 = vpop.f32.mrb[0].mxu0
      %1665 = vmatprep.mubr.bf16.mxu0 0
      %1666 = vmatmul.mubr.bf16.gmra.mrb[0].mxu0 %v1556
      %v1667 = vpop.f32.mrb[0].mxu0
      %v1668 = vadd.f32 0.0, %v1667
      %v1669 = vpop.f32.mrb[0].mxu0
      %v1670 = vpop.f32.mrb[0].mxu0
      %v1671 = vadd.f32 0.0, %v1670
      %v1672 = vpop.f32.mrb[0].mxu0
      %1673 = vmatprep.mubr.bf16.mxu0 0
      %1674 = vmatmul.mubr.bf16.gmra.mrb[0].mxu0 %v1559
      %v1675 = vpop.f32.mrb[0].mxu0
      %v1676 = vadd.f32 0.0, %v1675
      %v1677 = vpop.f32.mrb[0].mxu0
      %v1678 = vpop.f32.mrb[0].mxu0
      %v1679 = vadd.f32 0.0, %v1678
      %v1680 = vpop.f32.mrb[0].mxu0
      %1681 = vmatprep.mubr.bf16.mxu0 0
      %1682 = vmatmul.mubr.bf16.gmra.mrb[0].mxu0 %v1562
      %v1683 = vpop.f32.mrb[0].mxu0
      %v1684 = vadd.f32 0.0, %v1683
      %v1685 = vpop.f32.mrb[0].mxu0
      %v1686 = vpop.f32.mrb[0].mxu0
      %v1687 = vadd.f32 0.0, %v1686
      %v1688 = vpop.f32.mrb[0].mxu0
      %1689 = vmatprep.mubr.bf16.mxu0 0
      %1690 = vmatmul.mubr.bf16.gmra.mrb[0].mxu0 %v1565
      %v1691 = vpop.f32.mrb[0].mxu0
      %v1692 = vadd.f32 0.0, %v1691
      %v1693 = vpop.f32.mrb[0].mxu0
      %v1694 = vpop.f32.mrb[0].mxu0
      %v1695 = vadd.f32 0.0, %v1694
      %v1696 = vpop.f32.mrb[0].mxu0
      %1697 = vmatprep.mubr.bf16.mxu0 0
      %1698 = vmatmul.mubr.bf16.gmra.mrb[0].mxu0 %v1568
      %v1699 = vpop.f32.mrb[0].mxu0
      %v1700 = vadd.f32 0.0, %v1699
      %v1701 = vpop.f32.mrb[0].mxu0
      %v1702 = vpop.f32.mrb[0].mxu0
      %v1703 = vadd.f32 0.0, %v1702
      %v1704 = vpop.f32.mrb[0].mxu0
      %1705 = vmatprep.mubr.bf16.mxu0 0
      %1706 = vmatmul.mubr.bf16.gmra.mrb[0].mxu0 %v1571
      %v1707 = vpop.f32.mrb[0].mxu0
      %v1708 = vadd.f32 0.0, %v1707
      %v1709 = vpop.f32.mrb[0].mxu0
      %v1710 = vpop.f32.mrb[0].mxu0
      %v1711 = vadd.f32 0.0, %v1710
      %v1712 = vpop.f32.mrb[0].mxu0
      %1713 = vmatprep.mubr.bf16.mxu0 0
      %1714 = vmatmul.mubr.bf16.gmra.mrb[0].mxu0 %v1574
      %v1715 = vpop.f32.mrb[0].mxu0
      %v1716 = vadd.f32 0.0, %v1715
      %v1717 = vpop.f32.mrb[0].mxu0
      %v1718 = vpop.f32.mrb[0].mxu0
      %v1719 = vadd.f32 0.0, %v1718
      %v1720 = vpop.f32.mrb[0].mxu0
      %1721 = vmatprep.mubr.bf16.mxu0 0
      %1722 = vmatmul.mubr.bf16.gmra.mrb[0].mxu0 %v1577
      %v1723 = vpop.f32.mrb[0].mxu0
      %v1724 = vadd.f32 0.0, %v1723
      %v1725 = vpop.f32.mrb[0].mxu0
      %v1726 = vpop.f32.mrb[0].mxu0
      %v1727 = vadd.f32 0.0, %v1726
      %v1728 = vpop.f32.mrb[0].mxu0
      %1729 = vmatprep.mubr.bf16.mxu0 0
      %1730 = vmatmul.mubr.bf16.gmra.mrb[0].mxu0 %v1580
      %v1731 = vpop.f32.mrb[0].mxu0
      %v1732 = vadd.f32 0.0, %v1731
      %v1733 = vpop.f32.mrb[0].mxu0
      %v1734 = vpop.f32.mrb[0].mxu0
      %v1735 = vadd.f32 0.0, %v1734
      %v1736 = vpop.f32.mrb[0].mxu0
      %1737 = vmatprep.mubr.bf16.mxu0 0
      %1738 = vmatmul.mubr.bf16.gmra.mrb[0].mxu0 %v1583
      %v1739 = vpop.f32.mrb[0].mxu0
      %v1740 = vadd.f32 0.0, %v1739
      %v1741 = vpop.f32.mrb[0].mxu0
      %v1742 = vpop.f32.mrb[0].mxu0
      %v1743 = vadd.f32 0.0, %v1742
      %v1744 = vpop.f32.mrb[0].mxu0
      %1745 = vdwg.mxu0
      %v1748 = vunpack.c.l.b16 %v1510
      %v1749 = vunpack.c.l.b16 %v1511
      %v1750 = vpack.c.b16 %v1749, %v1748
      %v1753 = vsel %vm1536, %v1494, 0
      %v1756 = vsel %vm1536, %v1495, 0
      %v1759 = vsel %vm1536, %v1496, 0
      %v1762 = vsel %vm1536, %v1497, 0
      %v1765 = vsel %vm1536, %v1498, 0
      %v1768 = vsel %vm1536, %v1499, 0
      %v1771 = vsel %vm1536, %v1500, 0
      %v1774 = vsel %vm1536, %v1501, 0
      %v1777 = vsel %vm1536, %v1502, 0
      %v1780 = vsel %vm1536, %v1503, 0
      %v1783 = vsel %vm1536, %v1504, 0
      %v1786 = vsel %vm1536, %v1505, 0
      %v1789 = vsel %vm1536, %v1506, 0
      %v1792 = vsel %vm1536, %v1507, 0
      %v1795 = vsel %vm1536, %v1508, 0
      %v1798 = vsel %vm1536, %v1509, 0
      %1800 = vmatprep.subr.bf16.mxu0 0
      %1801 = vmatpush1.bf16.msra.mxu0 %v1750
      %1802 = vmatprep.subr.bf16.mxu0 0
      %1803 = vmatpush1.bf16.msra.mxu0 0
      %1804 = vmatprep.subr.bf16.mxu0 0
      %1805 = vmatpush1.bf16.msra.mxu0 0
      %1806 = vmatprep.subr.bf16.mxu0 0
      %1807 = vmatpush1.bf16.msra.mxu0 0
      %1808 = vmatprep.subr.bf16.mxu0 0
      %1809 = vmatpush1.bf16.msra.mxu0 0
      %1810 = vmatprep.subr.bf16.mxu0 0
      %1811 = vmatpush1.bf16.msra.mxu0 0
      %1812 = vmatprep.subr.bf16.mxu0 0
      %1813 = vmatpush1.bf16.msra.mxu0 0
      %1814 = vmatprep.subr.bf16.mxu0 0
      %1815 = vmatpush1.bf16.msra.mxu0 0
      %1816 = vmatprep.subr.bf16.mxu0 0
      %1817 = vmatpush1.bf16.msra.mxu0 0
      %1818 = vmatprep.subr.bf16.mxu0 0
      %1819 = vmatpush1.bf16.msra.mxu0 0
      %1820 = vmatprep.subr.bf16.mxu0 0
      %1821 = vmatpush1.bf16.msra.mxu0 0
      %1822 = vmatprep.subr.bf16.mxu0 0
      %1823 = vmatpush1.bf16.msra.mxu0 0
      %1824 = vmatprep.subr.bf16.mxu0 0
      %1825 = vmatpush1.bf16.msra.mxu0 0
      %1826 = vmatprep.subr.bf16.mxu0 0
      %1827 = vmatpush1.bf16.msra.mxu0 0
      %1828 = vmatprep.subr.bf16.mxu0 0
      %1829 = vmatpush1.bf16.msra.mxu0 0
      %1830 = vmatprep.subr.bf16.mxu0 0
      %1831 = vmatpush1.bf16.msra.mxu0 0
      %1832 = vmatprep.mubr.bf16.mxu0 0
      %1833 = vmatmul.mubr.bf16.gmra.mrb[0].mxu0 %v1753
      %v1834 = vpop.f32.mrb[0].mxu0
      %v1835 = vadd.f32 %v1620, %v1834
      %v1836 = vpop.f32.mrb[0].mxu0
      %v1837 = vpop.f32.mrb[0].mxu0
      %v1838 = vadd.f32 %v1623, %v1837
      %v1839 = vpop.f32.mrb[0].mxu0
      %1840 = vmatprep.mubr.bf16.mxu0 0
      %1841 = vmatmul.mubr.bf16.gmra.mrb[0].mxu0 %v1756
      %v1842 = vpop.f32.mrb[0].mxu0
      %v1843 = vadd.f32 %v1628, %v1842
      %v1844 = vpop.f32.mrb[0].mxu0
      %v1845 = vpop.f32.mrb[0].mxu0
      %v1846 = vadd.f32 %v1631, %v1845
      %v1847 = vpop.f32.mrb[0].mxu0
      %1848 = vmatprep.mubr.bf16.mxu0 0
      %1849 = vmatmul.mubr.bf16.gmra.mrb[0].mxu0 %v1759
      %v1850 = vpop.f32.mrb[0].mxu0
      %v1851 = vadd.f32 %v1636, %v1850
      %v1852 = vpop.f32.mrb[0].mxu0
      %v1853 = vpop.f32.mrb[0].mxu0
      %v1854 = vadd.f32 %v1639, %v1853
      %v1855 = vpop.f32.mrb[0].mxu0
      %1856 = vmatprep.mubr.bf16.mxu0 0
      %1857 = vmatmul.mubr.bf16.gmra.mrb[0].mxu0 %v1762
      %v1858 = vpop.f32.mrb[0].mxu0
      %v1859 = vadd.f32 %v1644, %v1858
      %v1860 = vpop.f32.mrb[0].mxu0
      %v1861 = vpop.f32.mrb[0].mxu0
      %v1862 = vadd.f32 %v1647, %v1861
      %v1863 = vpop.f32.mrb[0].mxu0
      %1864 = vmatprep.mubr.bf16.mxu0 0
      %1865 = vmatmul.mubr.bf16.gmra.mrb[0].mxu0 %v1765
      %v1866 = vpop.f32.mrb[0].mxu0
      %v1867 = vadd.f32 %v1652, %v1866
      %v1868 = vpop.f32.mrb[0].mxu0
      %v1869 = vpop.f32.mrb[0].mxu0
      %v1870 = vadd.f32 %v1655, %v1869
      %v1871 = vpop.f32.mrb[0].mxu0
      %1872 = vmatprep.mubr.bf16.mxu0 0
      %1873 = vmatmul.mubr.bf16.gmra.mrb[0].mxu0 %v1768
      %v1874 = vpop.f32.mrb[0].mxu0
      %v1875 = vadd.f32 %v1660, %v1874
      %v1876 = vpop.f32.mrb[0].mxu0
      %v1877 = vpop.f32.mrb[0].mxu0
      %v1878 = vadd.f32 %v1663, %v1877
      %v1879 = vpop.f32.mrb[0].mxu0
      %1880 = vmatprep.mubr.bf16.mxu0 0
      %1881 = vmatmul.mubr.bf16.gmra.mrb[0].mxu0 %v1771
      %v1882 = vpop.f32.mrb[0].mxu0
      %v1883 = vadd.f32 %v1668, %v1882
      %v1884 = vpop.f32.mrb[0].mxu0
      %v1885 = vpop.f32.mrb[0].mxu0
      %v1886 = vadd.f32 %v1671, %v1885
      %v1887 = vpop.f32.mrb[0].mxu0
      %1888 = vmatprep.mubr.bf16.mxu0 0
      %1889 = vmatmul.mubr.bf16.gmra.mrb[0].mxu0 %v1774
      %v1890 = vpop.f32.mrb[0].mxu0
      %v1891 = vadd.f32 %v1676, %v1890
      %v1892 = vpop.f32.mrb[0].mxu0
      %v1893 = vpop.f32.mrb[0].mxu0
      %v1894 = vadd.f32 %v1679, %v1893
      %v1895 = vpop.f32.mrb[0].mxu0
      %1896 = vmatprep.mubr.bf16.mxu0 0
      %1897 = vmatmul.mubr.bf16.gmra.mrb[0].mxu0 %v1777
      %v1898 = vpop.f32.mrb[0].mxu0
      %v1899 = vadd.f32 %v1684, %v1898
      %v1900 = vpop.f32.mrb[0].mxu0
      %v1901 = vpop.f32.mrb[0].mxu0
      %v1902 = vadd.f32 %v1687, %v1901
      %v1903 = vpop.f32.mrb[0].mxu0
      %1904 = vmatprep.mubr.bf16.mxu0 0
      %1905 = vmatmul.mubr.bf16.gmra.mrb[0].mxu0 %v1780
      %v1906 = vpop.f32.mrb[0].mxu0
      %v1907 = vadd.f32 %v1692, %v1906
      %v1908 = vpop.f32.mrb[0].mxu0
      %v1909 = vpop.f32.mrb[0].mxu0
      %v1910 = vadd.f32 %v1695, %v1909
      %v1911 = vpop.f32.mrb[0].mxu0
      %1912 = vmatprep.mubr.bf16.mxu0 0
      %1913 = vmatmul.mubr.bf16.gmra.mrb[0].mxu0 %v1783
      %v1914 = vpop.f32.mrb[0].mxu0
      %v1915 = vadd.f32 %v1700, %v1914
      %v1916 = vpop.f32.mrb[0].mxu0
      %v1917 = vpop.f32.mrb[0].mxu0
      %v1918 = vadd.f32 %v1703, %v1917
      %v1919 = vpop.f32.mrb[0].mxu0
      %1920 = vmatprep.mubr.bf16.mxu0 0
      %1921 = vmatmul.mubr.bf16.gmra.mrb[0].mxu0 %v1786
      %v1922 = vpop.f32.mrb[0].mxu0
      %v1923 = vadd.f32 %v1708, %v1922
      %v1924 = vpop.f32.mrb[0].mxu0
      %v1925 = vpop.f32.mrb[0].mxu0
      %v1926 = vadd.f32 %v1711, %v1925
      %v1927 = vpop.f32.mrb[0].mxu0
      %1928 = vmatprep.mubr.bf16.mxu0 0
      %1929 = vmatmul.mubr.bf16.gmra.mrb[0].mxu0 %v1789
      %v1930 = vpop.f32.mrb[0].mxu0
      %v1931 = vadd.f32 %v1716, %v1930
      %v1932 = vpop.f32.mrb[0].mxu0
      %v1933 = vpop.f32.mrb[0].mxu0
      %v1934 = vadd.f32 %v1719, %v1933
      %v1935 = vpop.f32.mrb[0].mxu0
      %1936 = vmatprep.mubr.bf16.mxu0 0
      %1937 = vmatmul.mubr.bf16.gmra.mrb[0].mxu0 %v1792
      %v1938 = vpop.f32.mrb[0].mxu0
      %v1939 = vadd.f32 %v1724, %v1938
      %v1940 = vpop.f32.mrb[0].mxu0
      %v1941 = vpop.f32.mrb[0].mxu0
      %v1942 = vadd.f32 %v1727, %v1941
      %v1943 = vpop.f32.mrb[0].mxu0
      %1944 = vmatprep.mubr.bf16.mxu0 0
      %1945 = vmatmul.mubr.bf16.gmra.mrb[0].mxu0 %v1795
      %v1946 = vpop.f32.mrb[0].mxu0
      %v1947 = vadd.f32 %v1732, %v1946
      %v1948 = vpop.f32.mrb[0].mxu0
      %v1949 = vpop.f32.mrb[0].mxu0
      %v1950 = vadd.f32 %v1735, %v1949
      %v1951 = vpop.f32.mrb[0].mxu0
      %1952 = vmatprep.mubr.bf16.mxu0 0
      %1953 = vmatmul.mubr.bf16.gmra.mrb[0].mxu0 %v1798
      %v1954 = vpop.f32.mrb[0].mxu0
      %v1955 = vadd.f32 %v1740, %v1954
      %v1956 = vpop.f32.mrb[0].mxu0
      %v1957 = vpop.f32.mrb[0].mxu0
      %v1958 = vadd.f32 %v1743, %v1957
      %v1959 = vpop.f32.mrb[0].mxu0
      %1960 = vdwg.mxu0
      %v1962 = vlaneseq
      %v1963 = vshrl.u32 %v1962, 7
      %v1964 = vsub.s32 0, %v1963
      %v1965 = vrot.slane %v1493, %v1964
      %v1967 = vadd.f32 %v1835, %v1965
      %v1968 = vadd.f32 %v1838, %v1965
      %v1969 = vadd.f32 %v1843, %v1965
      %v1970 = vadd.f32 %v1846, %v1965
      %v1971 = vadd.f32 %v1851, %v1965
      %v1972 = vadd.f32 %v1854, %v1965
      %v1973 = vadd.f32 %v1859, %v1965
      %v1974 = vadd.f32 %v1862, %v1965
      %v1975 = vadd.f32 %v1867, %v1965
      %v1976 = vadd.f32 %v1870, %v1965
      %v1977 = vadd.f32 %v1875, %v1965
      %v1978 = vadd.f32 %v1878, %v1965
      %v1979 = vadd.f32 %v1883, %v1965
      %v1980 = vadd.f32 %v1886, %v1965
      %v1981 = vadd.f32 %v1891, %v1965
      %v1982 = vadd.f32 %v1894, %v1965
      %v1983 = vadd.f32 %v1899, %v1965
      %v1984 = vadd.f32 %v1902, %v1965
      %v1985 = vadd.f32 %v1907, %v1965
      %v1986 = vadd.f32 %v1910, %v1965
      %v1987 = vadd.f32 %v1915, %v1965
      %v1988 = vadd.f32 %v1918, %v1965
      %v1989 = vadd.f32 %v1923, %v1965
      %v1990 = vadd.f32 %v1926, %v1965
      %v1991 = vadd.f32 %v1931, %v1965
      %v1992 = vadd.f32 %v1934, %v1965
      %v1993 = vadd.f32 %v1939, %v1965
      %v1994 = vadd.f32 %v1942, %v1965
      %v1995 = vadd.f32 %v1947, %v1965
      %v1996 = vadd.f32 %v1950, %v1965
      %v1997 = vadd.f32 %v1955, %v1965
      %v1998 = vadd.f32 %v1958, %v1965
      %v1999 = vmax.f32 %v1967, 0.0
      %v2000 = vmax.f32 %v1968, 0.0
      %v2001 = vmax.f32 %v1969, 0.0
      %v2002 = vmax.f32 %v1970, 0.0
      %v2003 = vmax.f32 %v1971, 0.0
      %v2004 = vmax.f32 %v1972, 0.0
      %v2005 = vmax.f32 %v1973, 0.0
      %v2006 = vmax.f32 %v1974, 0.0
      %v2007 = vmax.f32 %v1975, 0.0
      %v2008 = vmax.f32 %v1976, 0.0
      %v2009 = vmax.f32 %v1977, 0.0
      %v2010 = vmax.f32 %v1978, 0.0
      %v2011 = vmax.f32 %v1979, 0.0
      %v2012 = vmax.f32 %v1980, 0.0
      %v2013 = vmax.f32 %v1981, 0.0
      %v2014 = vmax.f32 %v1982, 0.0
      %v2015 = vmax.f32 %v1983, 0.0
      %v2016 = vmax.f32 %v1984, 0.0
      %v2017 = vmax.f32 %v1985, 0.0
      %v2018 = vmax.f32 %v1986, 0.0
      %v2019 = vmax.f32 %v1987, 0.0
      %v2020 = vmax.f32 %v1988, 0.0
      %v2021 = vmax.f32 %v1989, 0.0
      %v2022 = vmax.f32 %v1990, 0.0
      %v2023 = vmax.f32 %v1991, 0.0
      %v2024 = vmax.f32 %v1992, 0.0
      %v2025 = vmax.f32 %v1993, 0.0
      %v2026 = vmax.f32 %v1994, 0.0
      %v2027 = vmax.f32 %v1995, 0.0
      %v2028 = vmax.f32 %v1996, 0.0
      %v2029 = vmax.f32 %v1997, 0.0
      %v2030 = vmax.f32 %v1998, 0.0
      %v2031 = vld [vmem:[%s6] sm:$0xf]
      %v2032 = vld [vmem:[%s6 + $0x4] sm:$0xf]
      %v2033 = vld [vmem:[%s6 + $0x8] sm:$0xf]
      %v2034 = vld [vmem:[%s6 + $0xc] sm:$0xf]
      %v2035 = vld [vmem:[%s6 + $0x10] sm:$0xf]
      %v2036 = vld [vmem:[%s6 + $0x14] sm:$0xf]
      %v2037 = vld [vmem:[%s6 + $0x18] sm:$0xf]
      %v2038 = vld [vmem:[%s6 + $0x1c] sm:$0xf]
      %v2039 = vld [vmem:[%s7] sm:$0x1]
      %v2040 = vpack.c.bf16 %v2000, %v1999
      %v2041 = vpack.c.bf16 %v2002, %v2001
      %v2042 = vpack.c.bf16 %v2004, %v2003
      %v2043 = vpack.c.bf16 %v2006, %v2005
      %v2044 = vpack.c.bf16 %v2008, %v2007
      %v2045 = vpack.c.bf16 %v2010, %v2009
      %v2046 = vpack.c.bf16 %v2012, %v2011
      %v2047 = vpack.c.bf16 %v2014, %v2013
      %v2048 = vpack.c.bf16 %v2016, %v2015
      %v2049 = vpack.c.bf16 %v2018, %v2017
      %v2050 = vpack.c.bf16 %v2020, %v2019
      %v2051 = vpack.c.bf16 %v2022, %v2021
      %v2052 = vpack.c.bf16 %v2024, %v2023
      %v2053 = vpack.c.bf16 %v2026, %v2025
      %v2054 = vpack.c.bf16 %v2028, %v2027
      %v2055 = vpack.c.bf16 %v2030, %v2029
      %v2057 = vlaneseq
      %v2058 = vshrl.u32 %v2057, 7
      %v2059 = vsub.s32 0, %v2058
      %v2060 = vrot.slane %v2039, %v2059
      %v2070 = vunpack.c.l.b16 %v2031
      %v2071 = vunpack.c.l.b16 %v2032
      %v2072 = vunpack.c.l.b16 %v2033
      %v2073 = vunpack.c.l.b16 %v2034
      %v2074 = vunpack.c.l.b16 %v2035
      %v2075 = vunpack.c.l.b16 %v2036
      %v2076 = vunpack.c.l.b16 %v2037
      %v2077 = vunpack.c.l.b16 %v2038
      %v2078 = vpack.c.b16 %v2071, %v2070
      %v2079 = vpack.c.b16 %v2073, %v2072
      %v2080 = vpack.c.b16 %v2075, %v2074
      %v2081 = vpack.c.b16 %v2077, %v2076
      %vm2086 = vcmask 523264
      %v2088 = vsel %vm2086, %v2040, 0
      %v2091 = vsel %vm2086, %v2041, 0
      %v2094 = vsel %vm2086, %v2042, 0
      %v2097 = vsel %vm2086, %v2043, 0
      %v2100 = vsel %vm2086, %v2044, 0
      %v2103 = vsel %vm2086, %v2045, 0
      %v2106 = vsel %vm2086, %v2046, 0
      %v2109 = vsel %vm2086, %v2047, 0
      %v2112 = vsel %vm2086, %v2048, 0
      %v2115 = vsel %vm2086, %v2049, 0
      %v2118 = vsel %vm2086, %v2050, 0
      %v2121 = vsel %vm2086, %v2051, 0
      %v2124 = vsel %vm2086, %v2052, 0
      %v2127 = vsel %vm2086, %v2053, 0
      %v2130 = vsel %vm2086, %v2054, 0
      %v2133 = vsel %vm2086, %v2055, 0
      %2135 = vmatprep.subr.bf16.mxu0 0
      %2136 = vmatpush1.bf16.msra.mxu0 %v2078
      %2137 = vmatprep.subr.bf16.mxu0 0
      %2138 = vmatpush1.bf16.msra.mxu0 %v2079
      %2139 = vmatprep.subr.bf16.mxu0 0
      %2140 = vmatpush1.bf16.msra.mxu0 %v2080
      %2141 = vmatprep.subr.bf16.mxu0 0
      %2142 = vmatpush1.bf16.msra.mxu0 %v2081
      %2143 = vmatprep.subr.bf16.mxu0 0
      %2144 = vmatpush1.bf16.msra.mxu0 0
      %2145 = vmatprep.subr.bf16.mxu0 0
      %2146 = vmatpush1.bf16.msra.mxu0 0
      %2147 = vmatprep.subr.bf16.mxu0 0
      %2148 = vmatpush1.bf16.msra.mxu0 0
      %2149 = vmatprep.subr.bf16.mxu0 0
      %2150 = vmatpush1.bf16.msra.mxu0 0
      %2151 = vmatprep.subr.bf16.mxu0 0
      %2152 = vmatpush1.bf16.msra.mxu0 0
      %2153 = vmatprep.subr.bf16.mxu0 0
      %2154 = vmatpush1.bf16.msra.mxu0 0
      %2155 = vmatprep.subr.bf16.mxu0 0
      %2156 = vmatpush1.bf16.msra.mxu0 0
      %2157 = vmatprep.subr.bf16.mxu0 0
      %2158 = vmatpush1.bf16.msra.mxu0 0
      %2159 = vmatprep.subr.bf16.mxu0 0
      %2160 = vmatpush1.bf16.msra.mxu0 0
      %2161 = vmatprep.subr.bf16.mxu0 0
      %2162 = vmatpush1.bf16.msra.mxu0 0
      %2163 = vmatprep.subr.bf16.mxu0 0
      %2164 = vmatpush1.bf16.msra.mxu0 0
      %2165 = vmatprep.subr.bf16.mxu0 0
      %2166 = vmatpush1.bf16.msra.mxu0 0
      %2167 = vmatprep.mubr.bf16.mxu0 0
      %2168 = vmatmul.mubr.bf16.gmra.mrb[0].mxu0 %v2088
      %v2169 = vpop.f32.mrb[0].mxu0
      %v2170 = vadd.f32 %v2060, %v2169
      %v2171 = vpop.f32.mrb[0].mxu0
      %v2172 = vpop.f32.mrb[0].mxu0
      %v2173 = vadd.f32 %v2060, %v2172
      %v2174 = vpop.f32.mrb[0].mxu0
      %2175 = vmatprep.mubr.bf16.mxu0 0
      %2176 = vmatmul.mubr.bf16.gmra.mrb[0].mxu0 %v2091
      %v2177 = vpop.f32.mrb[0].mxu0
      %v2178 = vadd.f32 %v2060, %v2177
      %v2179 = vpop.f32.mrb[0].mxu0
      %v2180 = vpop.f32.mrb[0].mxu0
      %v2181 = vadd.f32 %v2060, %v2180
      %v2182 = vpop.f32.mrb[0].mxu0
      %2183 = vmatprep.mubr.bf16.mxu0 0
      %2184 = vmatmul.mubr.bf16.gmra.mrb[0].mxu0 %v2094
      %v2185 = vpop.f32.mrb[0].mxu0
      %v2186 = vadd.f32 %v2060, %v2185
      %v2187 = vpop.f32.mrb[0].mxu0
      %v2188 = vpop.f32.mrb[0].mxu0
      %v2189 = vadd.f32 %v2060, %v2188
      %v2190 = vpop.f32.mrb[0].mxu0
      %2191 = vmatprep.mubr.bf16.mxu0 0
      %2192 = vmatmul.mubr.bf16.gmra.mrb[0].mxu0 %v2097
      %v2193 = vpop.f32.mrb[0].mxu0
      %v2194 = vadd.f32 %v2060, %v2193
      %v2195 = vpop.f32.mrb[0].mxu0
      %v2196 = vpop.f32.mrb[0].mxu0
      %v2197 = vadd.f32 %v2060, %v2196
      %v2198 = vpop.f32.mrb[0].mxu0
      %2199 = vmatprep.mubr.bf16.mxu0 0
      %2200 = vmatmul.mubr.bf16.gmra.mrb[0].mxu0 %v2100
      %v2201 = vpop.f32.mrb[0].mxu0
      %v2202 = vadd.f32 %v2060, %v2201
      %v2203 = vpop.f32.mrb[0].mxu0
      %v2204 = vpop.f32.mrb[0].mxu0
      %v2205 = vadd.f32 %v2060, %v2204
      %v2206 = vpop.f32.mrb[0].mxu0
      %2207 = vmatprep.mubr.bf16.mxu0 0
      %2208 = vmatmul.mubr.bf16.gmra.mrb[0].mxu0 %v2103
      %v2209 = vpop.f32.mrb[0].mxu0
      %v2210 = vadd.f32 %v2060, %v2209
      %v2211 = vpop.f32.mrb[0].mxu0
      %v2212 = vpop.f32.mrb[0].mxu0
      %v2213 = vadd.f32 %v2060, %v2212
      %v2214 = vpop.f32.mrb[0].mxu0
      %2215 = vmatprep.mubr.bf16.mxu0 0
      %2216 = vmatmul.mubr.bf16.gmra.mrb[0].mxu0 %v2106
      %v2217 = vpop.f32.mrb[0].mxu0
      %v2218 = vadd.f32 %v2060, %v2217
      %v2219 = vpop.f32.mrb[0].mxu0
      %v2220 = vpop.f32.mrb[0].mxu0
      %v2221 = vadd.f32 %v2060, %v2220
      %v2222 = vpop.f32.mrb[0].mxu0
      %2223 = vmatprep.mubr.bf16.mxu0 0
      %2224 = vmatmul.mubr.bf16.gmra.mrb[0].mxu0 %v2109
      %v2225 = vpop.f32.mrb[0].mxu0
      %v2226 = vadd.f32 %v2060, %v2225
      %v2227 = vpop.f32.mrb[0].mxu0
      %v2228 = vpop.f32.mrb[0].mxu0
      %v2229 = vadd.f32 %v2060, %v2228
      %v2230 = vpop.f32.mrb[0].mxu0
      %2231 = vmatprep.mubr.bf16.mxu0 0
      %2232 = vmatmul.mubr.bf16.gmra.mrb[0].mxu0 %v2112
      %v2233 = vpop.f32.mrb[0].mxu0
      %v2234 = vadd.f32 %v2060, %v2233
      %v2235 = vpop.f32.mrb[0].mxu0
      %v2236 = vpop.f32.mrb[0].mxu0
      %v2237 = vadd.f32 %v2060, %v2236
      %v2238 = vpop.f32.mrb[0].mxu0
      %2239 = vmatprep.mubr.bf16.mxu0 0
      %2240 = vmatmul.mubr.bf16.gmra.mrb[0].mxu0 %v2115
      %v2241 = vpop.f32.mrb[0].mxu0
      %v2242 = vadd.f32 %v2060, %v2241
      %v2243 = vpop.f32.mrb[0].mxu0
      %v2244 = vpop.f32.mrb[0].mxu0
      %v2245 = vadd.f32 %v2060, %v2244
      %v2246 = vpop.f32.mrb[0].mxu0
      %2247 = vmatprep.mubr.bf16.mxu0 0
      %2248 = vmatmul.mubr.bf16.gmra.mrb[0].mxu0 %v2118
      %v2249 = vpop.f32.mrb[0].mxu0
      %v2250 = vadd.f32 %v2060, %v2249
      %v2251 = vpop.f32.mrb[0].mxu0
      %v2252 = vpop.f32.mrb[0].mxu0
      %v2253 = vadd.f32 %v2060, %v2252
      %v2254 = vpop.f32.mrb[0].mxu0
      %2255 = vmatprep.mubr.bf16.mxu0 0
      %2256 = vmatmul.mubr.bf16.gmra.mrb[0].mxu0 %v2121
      %v2257 = vpop.f32.mrb[0].mxu0
      %v2258 = vadd.f32 %v2060, %v2257
      %v2259 = vpop.f32.mrb[0].mxu0
      %v2260 = vpop.f32.mrb[0].mxu0
      %v2261 = vadd.f32 %v2060, %v2260
      %v2262 = vpop.f32.mrb[0].mxu0
      %2263 = vmatprep.mubr.bf16.mxu0 0
      %2264 = vmatmul.mubr.bf16.gmra.mrb[0].mxu0 %v2124
      %v2265 = vpop.f32.mrb[0].mxu0
      %v2266 = vadd.f32 %v2060, %v2265
      %v2267 = vpop.f32.mrb[0].mxu0
      %v2268 = vpop.f32.mrb[0].mxu0
      %v2269 = vadd.f32 %v2060, %v2268
      %v2270 = vpop.f32.mrb[0].mxu0
      %2271 = vmatprep.mubr.bf16.mxu0 0
      %2272 = vmatmul.mubr.bf16.gmra.mrb[0].mxu0 %v2127
      %v2273 = vpop.f32.mrb[0].mxu0
      %v2274 = vadd.f32 %v2060, %v2273
      %v2275 = vpop.f32.mrb[0].mxu0
      %v2276 = vpop.f32.mrb[0].mxu0
      %v2277 = vadd.f32 %v2060, %v2276
      %v2278 = vpop.f32.mrb[0].mxu0
      %2279 = vmatprep.mubr.bf16.mxu0 0
      %2280 = vmatmul.mubr.bf16.gmra.mrb[0].mxu0 %v2130
      %v2281 = vpop.f32.mrb[0].mxu0
      %v2282 = vadd.f32 %v2060, %v2281
      %v2283 = vpop.f32.mrb[0].mxu0
      %v2284 = vpop.f32.mrb[0].mxu0
      %v2285 = vadd.f32 %v2060, %v2284
      %v2286 = vpop.f32.mrb[0].mxu0
      %2287 = vmatprep.mubr.bf16.mxu0 0
      %2288 = vmatmul.mubr.bf16.gmra.mrb[0].mxu0 %v2133
      %v2289 = vpop.f32.mrb[0].mxu0
      %v2290 = vadd.f32 %v2060, %v2289
      %v2291 = vpop.f32.mrb[0].mxu0
      %v2292 = vpop.f32.mrb[0].mxu0
      %v2293 = vadd.f32 %v2060, %v2292
      %v2294 = vpop.f32.mrb[0].mxu0
      %2295 = vdwg.mxu0
      %v2296 = vmax.f32 %v2170, 0.0
      %v2297 = vmax.f32 %v2173, 0.0
      %v2298 = vmax.f32 %v2178, 0.0
      %v2299 = vmax.f32 %v2181, 0.0
      %v2300 = vmax.f32 %v2186, 0.0
      %v2301 = vmax.f32 %v2189, 0.0
      %v2302 = vmax.f32 %v2194, 0.0
      %v2303 = vmax.f32 %v2197, 0.0
      %v2304 = vmax.f32 %v2202, 0.0
      %v2305 = vmax.f32 %v2205, 0.0
      %v2306 = vmax.f32 %v2210, 0.0
      %v2307 = vmax.f32 %v2213, 0.0
      %v2308 = vmax.f32 %v2218, 0.0
      %v2309 = vmax.f32 %v2221, 0.0
      %v2310 = vmax.f32 %v2226, 0.0
      %v2311 = vmax.f32 %v2229, 0.0
      %v2312 = vmax.f32 %v2234, 0.0
      %v2313 = vmax.f32 %v2237, 0.0
      %v2314 = vmax.f32 %v2242, 0.0
      %v2315 = vmax.f32 %v2245, 0.0
      %v2316 = vmax.f32 %v2250, 0.0
      %v2317 = vmax.f32 %v2253, 0.0
      %v2318 = vmax.f32 %v2258, 0.0
      %v2319 = vmax.f32 %v2261, 0.0
      %v2320 = vmax.f32 %v2266, 0.0
      %v2321 = vmax.f32 %v2269, 0.0
      %v2322 = vmax.f32 %v2274, 0.0
      %v2323 = vmax.f32 %v2277, 0.0
      %v2324 = vmax.f32 %v2282, 0.0
      %v2325 = vmax.f32 %v2285, 0.0
      %v2326 = vmax.f32 %v2290, 0.0
      %v2327 = vmax.f32 %v2293, 0.0
      %v2328 = vld [vmem:[%s8] sm:$0xf]
      %v2329 = vld [vmem:[%s8 + $0x4] sm:$0xf]
      %v2330 = vld [vmem:[%s8 + $0x8] sm:$0xf]
      %v2331 = vld [vmem:[%s8 + $0xc] sm:$0xf]
      %v2332 = vld [vmem:[%s9] sm:$0x1]
      %v2333 = vpack.c.bf16 %v2297, %v2296
      %v2334 = vpack.c.bf16 %v2299, %v2298
      %v2335 = vpack.c.bf16 %v2301, %v2300
      %v2336 = vpack.c.bf16 %v2303, %v2302
      %v2337 = vpack.c.bf16 %v2305, %v2304
      %v2338 = vpack.c.bf16 %v2307, %v2306
      %v2339 = vpack.c.bf16 %v2309, %v2308
      %v2340 = vpack.c.bf16 %v2311, %v2310
      %v2341 = vpack.c.bf16 %v2313, %v2312
      %v2342 = vpack.c.bf16 %v2315, %v2314
      %v2343 = vpack.c.bf16 %v2317, %v2316
      %v2344 = vpack.c.bf16 %v2319, %v2318
      %v2345 = vpack.c.bf16 %v2321, %v2320
      %v2346 = vpack.c.bf16 %v2323, %v2322
      %v2347 = vpack.c.bf16 %v2325, %v2324
      %v2348 = vpack.c.bf16 %v2327, %v2326
      %v2350 = vlaneseq
      %v2351 = vshrl.u32 %v2350, 7
      %v2352 = vsub.s32 0, %v2351
      %v2353 = vrot.slane %v2332, %v2352
      %v2359 = vunpack.c.l.b16 %v2328
      %v2360 = vunpack.c.l.b16 %v2329
      %v2361 = vunpack.c.l.b16 %v2330
      %v2362 = vunpack.c.l.b16 %v2331
      %v2363 = vpack.c.b16 %v2360, %v2359
      %v2364 = vpack.c.b16 %v2362, %v2361
      %vm2367 = vcmask 261120
      %v2369 = vsel %vm2367, %v2333, 0
      %v2372 = vsel %vm2367, %v2334, 0
      %v2375 = vsel %vm2367, %v2335, 0
      %v2378 = vsel %vm2367, %v2336, 0
      %v2381 = vsel %vm2367, %v2337, 0
      %v2384 = vsel %vm2367, %v2338, 0
      %v2387 = vsel %vm2367, %v2339, 0
      %v2390 = vsel %vm2367, %v2340, 0
      %v2393 = vsel %vm2367, %v2341, 0
      %v2396 = vsel %vm2367, %v2342, 0
      %v2399 = vsel %vm2367, %v2343, 0
      %v2402 = vsel %vm2367, %v2344, 0
      %v2405 = vsel %vm2367, %v2345, 0
      %v2408 = vsel %vm2367, %v2346, 0
      %v2411 = vsel %vm2367, %v2347, 0
      %v2414 = vsel %vm2367, %v2348, 0
      %2416 = vmatprep.subr.bf16.mxu0 0
      %2417 = vmatpush1.bf16.msra.mxu0 %v2363
      %2418 = vmatprep.subr.bf16.mxu0 0
      %2419 = vmatpush1.bf16.msra.mxu0 %v2364
      %2420 = vmatprep.subr.bf16.mxu0 0
      %2421 = vmatpush1.bf16.msra.mxu0 0
      %2422 = vmatprep.subr.bf16.mxu0 0
      %2423 = vmatpush1.bf16.msra.mxu0 0
      %2424 = vmatprep.subr.bf16.mxu0 0
      %2425 = vmatpush1.bf16.msra.mxu0 0
      %2426 = vmatprep.subr.bf16.mxu0 0
      %2427 = vmatpush1.bf16.msra.mxu0 0
      %2428 = vmatprep.subr.bf16.mxu0 0
      %2429 = vmatpush1.bf16.msra.mxu0 0
      %2430 = vmatprep.subr.bf16.mxu0 0
      %2431 = vmatpush1.bf16.msra.mxu0 0
      %2432 = vmatprep.subr.bf16.mxu0 0
      %2433 = vmatpush1.bf16.msra.mxu0 0
      %2434 = vmatprep.subr.bf16.mxu0 0
      %2435 = vmatpush1.bf16.msra.mxu0 0
      %2436 = vmatprep.subr.bf16.mxu0 0
      %2437 = vmatpush1.bf16.msra.mxu0 0
      %2438 = vmatprep.subr.bf16.mxu0 0
      %2439 = vmatpush1.bf16.msra.mxu0 0
      %2440 = vmatprep.subr.bf16.mxu0 0
      %2441 = vmatpush1.bf16.msra.mxu0 0
      %2442 = vmatprep.subr.bf16.mxu0 0
      %2443 = vmatpush1.bf16.msra.mxu0 0
      %2444 = vmatprep.subr.bf16.mxu0 0
      %2445 = vmatpush1.bf16.msra.mxu0 0
      %2446 = vmatprep.subr.bf16.mxu0 0
      %2447 = vmatpush1.bf16.msra.mxu0 0
      %2448 = vmatprep.mubr.bf16.mxu0 0
      %2449 = vmatmul.mubr.bf16.gmra.mrb[0].mxu0 %v2369
      %v2450 = vpop.f32.mrb[0].mxu0
      %v2451 = vadd.f32 %v2353, %v2450
      %v2452 = vpop.f32.mrb[0].mxu0
      %v2453 = vpop.f32.mrb[0].mxu0
      %v2454 = vadd.f32 %v2353, %v2453
      %v2455 = vpop.f32.mrb[0].mxu0
      %2456 = vmatprep.mubr.bf16.mxu0 0
      %2457 = vmatmul.mubr.bf16.gmra.mrb[0].mxu0 %v2372
      %v2458 = vpop.f32.mrb[0].mxu0
      %v2459 = vadd.f32 %v2353, %v2458
      %v2460 = vpop.f32.mrb[0].mxu0
      %v2461 = vpop.f32.mrb[0].mxu0
      %v2462 = vadd.f32 %v2353, %v2461
      %v2463 = vpop.f32.mrb[0].mxu0
      %2464 = vmatprep.mubr.bf16.mxu0 0
      %2465 = vmatmul.mubr.bf16.gmra.mrb[0].mxu0 %v2375
      %v2466 = vpop.f32.mrb[0].mxu0
      %v2467 = vadd.f32 %v2353, %v2466
      %v2468 = vpop.f32.mrb[0].mxu0
      %v2469 = vpop.f32.mrb[0].mxu0
      %v2470 = vadd.f32 %v2353, %v2469
      %v2471 = vpop.f32.mrb[0].mxu0
      %2472 = vmatprep.mubr.bf16.mxu0 0
      %2473 = vmatmul.mubr.bf16.gmra.mrb[0].mxu0 %v2378
      %v2474 = vpop.f32.mrb[0].mxu0
      %v2475 = vadd.f32 %v2353, %v2474
      %v2476 = vpop.f32.mrb[0].mxu0
      %v2477 = vpop.f32.mrb[0].mxu0
      %v2478 = vadd.f32 %v2353, %v2477
      %v2479 = vpop.f32.mrb[0].mxu0
      %2480 = vmatprep.mubr.bf16.mxu0 0
      %2481 = vmatmul.mubr.bf16.gmra.mrb[0].mxu0 %v2381
      %v2482 = vpop.f32.mrb[0].mxu0
      %v2483 = vadd.f32 %v2353, %v2482
      %v2484 = vpop.f32.mrb[0].mxu0
      %v2485 = vpop.f32.mrb[0].mxu0
      %v2486 = vadd.f32 %v2353, %v2485
      %v2487 = vpop.f32.mrb[0].mxu0
      %2488 = vmatprep.mubr.bf16.mxu0 0
      %2489 = vmatmul.mubr.bf16.gmra.mrb[0].mxu0 %v2384
      %v2490 = vpop.f32.mrb[0].mxu0
      %v2491 = vadd.f32 %v2353, %v2490
      %v2492 = vpop.f32.mrb[0].mxu0
      %v2493 = vpop.f32.mrb[0].mxu0
      %v2494 = vadd.f32 %v2353, %v2493
      %v2495 = vpop.f32.mrb[0].mxu0
      %2496 = vmatprep.mubr.bf16.mxu0 0
      %2497 = vmatmul.mubr.bf16.gmra.mrb[0].mxu0 %v2387
      %v2498 = vpop.f32.mrb[0].mxu0
      %v2499 = vadd.f32 %v2353, %v2498
      %v2500 = vpop.f32.mrb[0].mxu0
      %v2501 = vpop.f32.mrb[0].mxu0
      %v2502 = vadd.f32 %v2353, %v2501
      %v2503 = vpop.f32.mrb[0].mxu0
      %2504 = vmatprep.mubr.bf16.mxu0 0
      %2505 = vmatmul.mubr.bf16.gmra.mrb[0].mxu0 %v2390
      %v2506 = vpop.f32.mrb[0].mxu0
      %v2507 = vadd.f32 %v2353, %v2506
      %v2508 = vpop.f32.mrb[0].mxu0
      %v2509 = vpop.f32.mrb[0].mxu0
      %v2510 = vadd.f32 %v2353, %v2509
      %v2511 = vpop.f32.mrb[0].mxu0
      %2512 = vmatprep.mubr.bf16.mxu0 0
      %2513 = vmatmul.mubr.bf16.gmra.mrb[0].mxu0 %v2393
      %v2514 = vpop.f32.mrb[0].mxu0
      %v2515 = vadd.f32 %v2353, %v2514
      %v2516 = vpop.f32.mrb[0].mxu0
      %v2517 = vpop.f32.mrb[0].mxu0
      %v2518 = vadd.f32 %v2353, %v2517
      %v2519 = vpop.f32.mrb[0].mxu0
      %2520 = vmatprep.mubr.bf16.mxu0 0
      %2521 = vmatmul.mubr.bf16.gmra.mrb[0].mxu0 %v2396
      %v2522 = vpop.f32.mrb[0].mxu0
      %v2523 = vadd.f32 %v2353, %v2522
      %v2524 = vpop.f32.mrb[0].mxu0
      %v2525 = vpop.f32.mrb[0].mxu0
      %v2526 = vadd.f32 %v2353, %v2525
      %v2527 = vpop.f32.mrb[0].mxu0
      %2528 = vmatprep.mubr.bf16.mxu0 0
      %2529 = vmatmul.mubr.bf16.gmra.mrb[0].mxu0 %v2399
      %v2530 = vpop.f32.mrb[0].mxu0
      %v2531 = vadd.f32 %v2353, %v2530
      %v2532 = vpop.f32.mrb[0].mxu0
      %v2533 = vpop.f32.mrb[0].mxu0
      %v2534 = vadd.f32 %v2353, %v2533
      %v2535 = vpop.f32.mrb[0].mxu0
      %2536 = vmatprep.mubr.bf16.mxu0 0
      %2537 = vmatmul.mubr.bf16.gmra.mrb[0].mxu0 %v2402
      %v2538 = vpop.f32.mrb[0].mxu0
      %v2539 = vadd.f32 %v2353, %v2538
      %v2540 = vpop.f32.mrb[0].mxu0
      %v2541 = vpop.f32.mrb[0].mxu0
      %v2542 = vadd.f32 %v2353, %v2541
      %v2543 = vpop.f32.mrb[0].mxu0
      %2544 = vmatprep.mubr.bf16.mxu0 0
      %2545 = vmatmul.mubr.bf16.gmra.mrb[0].mxu0 %v2405
      %v2546 = vpop.f32.mrb[0].mxu0
      %v2547 = vadd.f32 %v2353, %v2546
      %v2548 = vpop.f32.mrb[0].mxu0
      %v2549 = vpop.f32.mrb[0].mxu0
      %v2550 = vadd.f32 %v2353, %v2549
      %v2551 = vpop.f32.mrb[0].mxu0
      %2552 = vmatprep.mubr.bf16.mxu0 0
      %2553 = vmatmul.mubr.bf16.gmra.mrb[0].mxu0 %v2408
      %v2554 = vpop.f32.mrb[0].mxu0
      %v2555 = vadd.f32 %v2353, %v2554
      %v2556 = vpop.f32.mrb[0].mxu0
      %v2557 = vpop.f32.mrb[0].mxu0
      %v2558 = vadd.f32 %v2353, %v2557
      %v2559 = vpop.f32.mrb[0].mxu0
      %2560 = vmatprep.mubr.bf16.mxu0 0
      %2561 = vmatmul.mubr.bf16.gmra.mrb[0].mxu0 %v2411
      %v2562 = vpop.f32.mrb[0].mxu0
      %v2563 = vadd.f32 %v2353, %v2562
      %v2564 = vpop.f32.mrb[0].mxu0
      %v2565 = vpop.f32.mrb[0].mxu0
      %v2566 = vadd.f32 %v2353, %v2565
      %v2567 = vpop.f32.mrb[0].mxu0
      %2568 = vmatprep.mubr.bf16.mxu0 0
      %2569 = vmatmul.mubr.bf16.gmra.mrb[0].mxu0 %v2414
      %v2570 = vpop.f32.mrb[0].mxu0
      %v2571 = vadd.f32 %v2353, %v2570
      %v2572 = vpop.f32.mrb[0].mxu0
      %v2573 = vpop.f32.mrb[0].mxu0
      %v2574 = vadd.f32 %v2353, %v2573
      %v2575 = vpop.f32.mrb[0].mxu0
      %2576 = vdwg.mxu0
      %v2577 = vmax.f32 %v2451, 0.0
      %v2578 = vmax.f32 %v2454, 0.0
      %v2579 = vmax.f32 %v2459, 0.0
      %v2580 = vmax.f32 %v2462, 0.0
      %v2581 = vmax.f32 %v2467, 0.0
      %v2582 = vmax.f32 %v2470, 0.0
      %v2583 = vmax.f32 %v2475, 0.0
      %v2584 = vmax.f32 %v2478, 0.0
      %v2585 = vmax.f32 %v2483, 0.0
      %v2586 = vmax.f32 %v2486, 0.0
      %v2587 = vmax.f32 %v2491, 0.0
      %v2588 = vmax.f32 %v2494, 0.0
      %v2589 = vmax.f32 %v2499, 0.0
      %v2590 = vmax.f32 %v2502, 0.0
      %v2591 = vmax.f32 %v2507, 0.0
      %v2592 = vmax.f32 %v2510, 0.0
      %v2593 = vmax.f32 %v2515, 0.0
      %v2594 = vmax.f32 %v2518, 0.0
      %v2595 = vmax.f32 %v2523, 0.0
      %v2596 = vmax.f32 %v2526, 0.0
      %v2597 = vmax.f32 %v2531, 0.0
      %v2598 = vmax.f32 %v2534, 0.0
      %v2599 = vmax.f32 %v2539, 0.0
      %v2600 = vmax.f32 %v2542, 0.0
      %v2601 = vmax.f32 %v2547, 0.0
      %v2602 = vmax.f32 %v2550, 0.0
      %v2603 = vmax.f32 %v2555, 0.0
      %v2604 = vmax.f32 %v2558, 0.0
      %v2605 = vmax.f32 %v2563, 0.0
      %v2606 = vmax.f32 %v2566, 0.0
      %v2607 = vmax.f32 %v2571, 0.0
      %v2608 = vmax.f32 %v2574, 0.0
      %v2609 = vld [vmem:[%s10] sm:$0x1]
      %v2610 = vld [vmem:[#allocation2] sm:$0x1]
      %v2612 = vlaneseq
      %v2613 = vshrl.u32 %v2612, 7
      %v2614 = vsub.s32 0, %v2613
      %v2615 = vrot.slane %v2609, %v2614
      %v2617 = vmul.f32 %v2577, %v2615
      %v2618 = vmul.f32 %v2578, %v2615
      %v2619 = vmul.f32 %v2579, %v2615
      %v2620 = vmul.f32 %v2580, %v2615
      %v2621 = vmul.f32 %v2581, %v2615
      %v2622 = vmul.f32 %v2582, %v2615
      %v2623 = vmul.f32 %v2583, %v2615
      %v2624 = vmul.f32 %v2584, %v2615
      %v2625 = vmul.f32 %v2585, %v2615
      %v2626 = vmul.f32 %v2586, %v2615
      %v2627 = vmul.f32 %v2587, %v2615
      %v2628 = vmul.f32 %v2588, %v2615
      %v2629 = vmul.f32 %v2589, %v2615
      %v2630 = vmul.f32 %v2590, %v2615
      %v2631 = vmul.f32 %v2591, %v2615
      %v2632 = vmul.f32 %v2592, %v2615
      %v2633 = vmul.f32 %v2593, %v2615
      %v2634 = vmul.f32 %v2594, %v2615
      %v2635 = vmul.f32 %v2595, %v2615
      %v2636 = vmul.f32 %v2596, %v2615
      %v2637 = vmul.f32 %v2597, %v2615
      %v2638 = vmul.f32 %v2598, %v2615
      %v2639 = vmul.f32 %v2599, %v2615
      %v2640 = vmul.f32 %v2600, %v2615
      %v2641 = vmul.f32 %v2601, %v2615
      %v2642 = vmul.f32 %v2602, %v2615
      %v2643 = vmul.f32 %v2603, %v2615
      %v2644 = vmul.f32 %v2604, %v2615
      %v2645 = vmul.f32 %v2605, %v2615
      %v2646 = vmul.f32 %v2606, %v2615
      %v2647 = vmul.f32 %v2607, %v2615
      %v2648 = vmul.f32 %v2608, %v2615
      %v2649 = vsel %vm1536, %v2617, 0.0
      %2650 = vadd.xlane.f32.xlu0 %v2649
      %v2651 = vpop.xlane.xlu0 %2650
      %v2652 = vsel %vm1536, %v2618, 0.0
      %2653 = vadd.xlane.f32.xlu0 %v2652
      %v2654 = vpop.xlane.xlu0 %2653
      %v2655 = vsel %vm1536, %v2619, 0.0
      %2656 = vadd.xlane.f32.xlu0 %v2655
      %v2657 = vpop.xlane.xlu0 %2656
      %v2658 = vsel %vm1536, %v2620, 0.0
      %2659 = vadd.xlane.f32.xlu0 %v2658
      %v2660 = vpop.xlane.xlu0 %2659
      %v2661 = vsel %vm1536, %v2621, 0.0
      %2662 = vadd.xlane.f32.xlu0 %v2661
      %v2663 = vpop.xlane.xlu0 %2662
      %v2664 = vsel %vm1536, %v2622, 0.0
      %2665 = vadd.xlane.f32.xlu0 %v2664
      %v2666 = vpop.xlane.xlu0 %2665
      %v2667 = vsel %vm1536, %v2623, 0.0
      %2668 = vadd.xlane.f32.xlu0 %v2667
      %v2669 = vpop.xlane.xlu0 %2668
      %v2670 = vsel %vm1536, %v2624, 0.0
      %2671 = vadd.xlane.f32.xlu0 %v2670
      %v2672 = vpop.xlane.xlu0 %2671
      %v2673 = vsel %vm1536, %v2625, 0.0
      %2674 = vadd.xlane.f32.xlu0 %v2673
      %v2675 = vpop.xlane.xlu0 %2674
      %v2676 = vsel %vm1536, %v2626, 0.0
      %2677 = vadd.xlane.f32.xlu0 %v2676
      %v2678 = vpop.xlane.xlu0 %2677
      %v2679 = vsel %vm1536, %v2627, 0.0
      %2680 = vadd.xlane.f32.xlu0 %v2679
      %v2681 = vpop.xlane.xlu0 %2680
      %v2682 = vsel %vm1536, %v2628, 0.0
      %2683 = vadd.xlane.f32.xlu0 %v2682
      %v2684 = vpop.xlane.xlu0 %2683
      %v2685 = vsel %vm1536, %v2629, 0.0
      %2686 = vadd.xlane.f32.xlu0 %v2685
      %v2687 = vpop.xlane.xlu0 %2686
      %v2688 = vsel %vm1536, %v2630, 0.0
      %2689 = vadd.xlane.f32.xlu0 %v2688
      %v2690 = vpop.xlane.xlu0 %2689
      %v2691 = vsel %vm1536, %v2631, 0.0
      %2692 = vadd.xlane.f32.xlu0 %v2691
      %v2693 = vpop.xlane.xlu0 %2692
      %v2694 = vsel %vm1536, %v2632, 0.0
      %2695 = vadd.xlane.f32.xlu0 %v2694
      %v2696 = vpop.xlane.xlu0 %2695
      %v2697 = vsel %vm1536, %v2633, 0.0
      %2698 = vadd.xlane.f32.xlu0 %v2697
      %v2699 = vpop.xlane.xlu0 %2698
      %v2700 = vsel %vm1536, %v2634, 0.0
      %2701 = vadd.xlane.f32.xlu0 %v2700
      %v2702 = vpop.xlane.xlu0 %2701
      %v2703 = vsel %vm1536, %v2635, 0.0
      %2704 = vadd.xlane.f32.xlu0 %v2703
      %v2705 = vpop.xlane.xlu0 %2704
      %v2706 = vsel %vm1536, %v2636, 0.0
      %2707 = vadd.xlane.f32.xlu0 %v2706
      %v2708 = vpop.xlane.xlu0 %2707
      %v2709 = vsel %vm1536, %v2637, 0.0
      %2710 = vadd.xlane.f32.xlu0 %v2709
      %v2711 = vpop.xlane.xlu0 %2710
      %v2712 = vsel %vm1536, %v2638, 0.0
      %2713 = vadd.xlane.f32.xlu0 %v2712
      %v2714 = vpop.xlane.xlu0 %2713
      %v2715 = vsel %vm1536, %v2639, 0.0
      %2716 = vadd.xlane.f32.xlu0 %v2715
      %v2717 = vpop.xlane.xlu0 %2716
      %v2718 = vsel %vm1536, %v2640, 0.0
      %2719 = vadd.xlane.f32.xlu0 %v2718
      %v2720 = vpop.xlane.xlu0 %2719
      %v2721 = vsel %vm1536, %v2641, 0.0
      %2722 = vadd.xlane.f32.xlu0 %v2721
      %v2723 = vpop.xlane.xlu0 %2722
      %v2724 = vsel %vm1536, %v2642, 0.0
      %2725 = vadd.xlane.f32.xlu0 %v2724
      %v2726 = vpop.xlane.xlu0 %2725
      %v2727 = vsel %vm1536, %v2643, 0.0
      %2728 = vadd.xlane.f32.xlu0 %v2727
      %v2729 = vpop.xlane.xlu0 %2728
      %v2730 = vsel %vm1536, %v2644, 0.0
      %2731 = vadd.xlane.f32.xlu0 %v2730
      %v2732 = vpop.xlane.xlu0 %2731
      %v2733 = vsel %vm1536, %v2645, 0.0
      %2734 = vadd.xlane.f32.xlu0 %v2733
      %v2735 = vpop.xlane.xlu0 %2734
      %v2736 = vsel %vm1536, %v2646, 0.0
      %2737 = vadd.xlane.f32.xlu0 %v2736
      %v2738 = vpop.xlane.xlu0 %2737
      %v2739 = vsel %vm1536, %v2647, 0.0
      %2740 = vadd.xlane.f32.xlu0 %v2739
      %v2741 = vpop.xlane.xlu0 %2740
      %v2742 = vsel %vm1536, %v2648, 0.0
      %2743 = vadd.xlane.f32.xlu0 %v2742
      %v2744 = vpop.xlane.xlu0 %2743
      %v2746 = vlaneseq
      %v2747 = vshrl.u32 %v2746, 7
      %v2748 = vsub.s32 0, %v2747
      %v2749 = vrot.slane %v2610, %v2748
      %v2751 = vadd.f32 %v2651, %v2749
      %v2752 = vadd.f32 %v2654, %v2749
      %v2753 = vadd.f32 %v2657, %v2749
      %v2754 = vadd.f32 %v2660, %v2749
      %v2755 = vadd.f32 %v2663, %v2749
      %v2756 = vadd.f32 %v2666, %v2749
      %v2757 = vadd.f32 %v2669, %v2749
      %v2758 = vadd.f32 %v2672, %v2749
      %v2759 = vadd.f32 %v2675, %v2749
      %v2760 = vadd.f32 %v2678, %v2749
      %v2761 = vadd.f32 %v2681, %v2749
      %v2762 = vadd.f32 %v2684, %v2749
      %v2763 = vadd.f32 %v2687, %v2749
      %v2764 = vadd.f32 %v2690, %v2749
      %v2765 = vadd.f32 %v2693, %v2749
      %v2766 = vadd.f32 %v2696, %v2749
      %v2767 = vadd.f32 %v2699, %v2749
      %v2768 = vadd.f32 %v2702, %v2749
      %v2769 = vadd.f32 %v2705, %v2749
      %v2770 = vadd.f32 %v2708, %v2749
      %v2771 = vadd.f32 %v2711, %v2749
      %v2772 = vadd.f32 %v2714, %v2749
      %v2773 = vadd.f32 %v2717, %v2749
      %v2774 = vadd.f32 %v2720, %v2749
      %v2775 = vadd.f32 %v2723, %v2749
      %v2776 = vadd.f32 %v2726, %v2749
      %v2777 = vadd.f32 %v2729, %v2749
      %v2778 = vadd.f32 %v2732, %v2749
      %v2779 = vadd.f32 %v2735, %v2749
      %v2780 = vadd.f32 %v2738, %v2749
      %v2781 = vadd.f32 %v2741, %v2749
      %v2782 = vadd.f32 %v2744, %v2749
      %v2783 = vxor.u32 %v2751, 2147483648
      %v2784 = vxor.u32 %v2752, 2147483648
      %v2785 = vxor.u32 %v2753, 2147483648
      %v2786 = vxor.u32 %v2754, 2147483648
      %v2787 = vxor.u32 %v2755, 2147483648
      %v2788 = vxor.u32 %v2756, 2147483648
      %v2789 = vxor.u32 %v2757, 2147483648
      %v2790 = vxor.u32 %v2758, 2147483648
      %v2791 = vxor.u32 %v2759, 2147483648
      %v2792 = vxor.u32 %v2760, 2147483648
      %v2793 = vxor.u32 %v2761, 2147483648
      %v2794 = vxor.u32 %v2762, 2147483648
      %v2795 = vxor.u32 %v2763, 2147483648
      %v2796 = vxor.u32 %v2764, 2147483648
      %v2797 = vxor.u32 %v2765, 2147483648
      %v2798 = vxor.u32 %v2766, 2147483648
      %v2799 = vxor.u32 %v2767, 2147483648
      %v2800 = vxor.u32 %v2768, 2147483648
      %v2801 = vxor.u32 %v2769, 2147483648
      %v2802 = vxor.u32 %v2770, 2147483648
      %v2803 = vxor.u32 %v2771, 2147483648
      %v2804 = vxor.u32 %v2772, 2147483648
      %v2805 = vxor.u32 %v2773, 2147483648
      %v2806 = vxor.u32 %v2774, 2147483648
      %v2807 = vxor.u32 %v2775, 2147483648
      %v2808 = vxor.u32 %v2776, 2147483648
      %v2809 = vxor.u32 %v2777, 2147483648
      %v2810 = vxor.u32 %v2778, 2147483648
      %v2811 = vxor.u32 %v2779, 2147483648
      %v2812 = vxor.u32 %v2780, 2147483648
      %v2813 = vxor.u32 %v2781, 2147483648
      %v2814 = vxor.u32 %v2782, 2147483648
      %v2815 = vmul.f32 %v2783, 1.442695
      %v2816 = vpow.pop %v2815
      %v2817 = vmul.f32 %v2784, 1.442695
      %v2818 = vpow.pop %v2817
      %v2819 = vmul.f32 %v2785, 1.442695
      %v2820 = vpow.pop %v2819
      %v2821 = vmul.f32 %v2786, 1.442695
      %v2822 = vpow.pop %v2821
      %v2823 = vmul.f32 %v2787, 1.442695
      %v2824 = vpow.pop %v2823
      %v2825 = vmul.f32 %v2788, 1.442695
      %v2826 = vpow.pop %v2825
      %v2827 = vmul.f32 %v2789, 1.442695
      %v2828 = vpow.pop %v2827
      %v2829 = vmul.f32 %v2790, 1.442695
      %v2830 = vpow.pop %v2829
      %v2831 = vmul.f32 %v2791, 1.442695
      %v2832 = vpow.pop %v2831
      %v2833 = vmul.f32 %v2792, 1.442695
      %v2834 = vpow.pop %v2833
      %v2835 = vmul.f32 %v2793, 1.442695
      %v2836 = vpow.pop %v2835
      %v2837 = vmul.f32 %v2794, 1.442695
      %v2838 = vpow.pop %v2837
      %v2839 = vmul.f32 %v2795, 1.442695
      %v2840 = vpow.pop %v2839
      %v2841 = vmul.f32 %v2796, 1.442695
      %v2842 = vpow.pop %v2841
      %v2843 = vmul.f32 %v2797, 1.442695
      %v2844 = vpow.pop %v2843
      %v2845 = vmul.f32 %v2798, 1.442695
      %v2846 = vpow.pop %v2845
      %v2847 = vmul.f32 %v2799, 1.442695
      %v2848 = vpow.pop %v2847
      %v2849 = vmul.f32 %v2800, 1.442695
      %v2850 = vpow.pop %v2849
      %v2851 = vmul.f32 %v2801, 1.442695
      %v2852 = vpow.pop %v2851
      %v2853 = vmul.f32 %v2802, 1.442695
      %v2854 = vpow.pop %v2853
      %v2855 = vmul.f32 %v2803, 1.442695
      %v2856 = vpow.pop %v2855
      %v2857 = vmul.f32 %v2804, 1.442695
      %v2858 = vpow.pop %v2857
      %v2859 = vmul.f32 %v2805, 1.442695
      %v2860 = vpow.pop %v2859
      %v2861 = vmul.f32 %v2806, 1.442695
      %v2862 = vpow.pop %v2861
      %v2863 = vmul.f32 %v2807, 1.442695
      %v2864 = vpow.pop %v2863
      %v2865 = vmul.f32 %v2808, 1.442695
      %v2866 = vpow.pop %v2865
      %v2867 = vmul.f32 %v2809, 1.442695
      %v2868 = vpow.pop %v2867
      %v2869 = vmul.f32 %v2810, 1.442695
      %v2870 = vpow.pop %v2869
      %v2871 = vmul.f32 %v2811, 1.442695
      %v2872 = vpow.pop %v2871
      %v2873 = vmul.f32 %v2812, 1.442695
      %v2874 = vpow.pop %v2873
      %v2875 = vmul.f32 %v2813, 1.442695
      %v2876 = vpow.pop %v2875
      %v2877 = vmul.f32 %v2814, 1.442695
      %v2878 = vpow.pop %v2877
      %v2879 = vadd.f32 %v2816, 1.0
      %v2880 = vadd.f32 %v2818, 1.0
      %v2881 = vadd.f32 %v2820, 1.0
      %v2882 = vadd.f32 %v2822, 1.0
      %v2883 = vadd.f32 %v2824, 1.0
      %v2884 = vadd.f32 %v2826, 1.0
      %v2885 = vadd.f32 %v2828, 1.0
      %v2886 = vadd.f32 %v2830, 1.0
      %v2887 = vadd.f32 %v2832, 1.0
      %v2888 = vadd.f32 %v2834, 1.0
      %v2889 = vadd.f32 %v2836, 1.0
      %v2890 = vadd.f32 %v2838, 1.0
      %v2891 = vadd.f32 %v2840, 1.0
      %v2892 = vadd.f32 %v2842, 1.0
      %v2893 = vadd.f32 %v2844, 1.0
      %v2894 = vadd.f32 %v2846, 1.0
      %v2895 = vadd.f32 %v2848, 1.0
      %v2896 = vadd.f32 %v2850, 1.0
      %v2897 = vadd.f32 %v2852, 1.0
      %v2898 = vadd.f32 %v2854, 1.0
      %v2899 = vadd.f32 %v2856, 1.0
      %v2900 = vadd.f32 %v2858, 1.0
      %v2901 = vadd.f32 %v2860, 1.0
      %v2902 = vadd.f32 %v2862, 1.0
      %v2903 = vadd.f32 %v2864, 1.0
      %v2904 = vadd.f32 %v2866, 1.0
      %v2905 = vadd.f32 %v2868, 1.0
      %v2906 = vadd.f32 %v2870, 1.0
      %v2907 = vadd.f32 %v2872, 1.0
      %v2908 = vadd.f32 %v2874, 1.0
      %v2909 = vadd.f32 %v2876, 1.0
      %v2910 = vadd.f32 %v2878, 1.0
      %v2911 = vrcp.pop %v2879
      %v2912 = vmul.f32 1.0, %v2911
      %v2913 = vrcp.pop %v2880
      %v2914 = vmul.f32 1.0, %v2913
      %v2915 = vrcp.pop %v2881
      %v2916 = vmul.f32 1.0, %v2915
      %v2917 = vrcp.pop %v2882
      %v2918 = vmul.f32 1.0, %v2917
      %v2919 = vrcp.pop %v2883
      %v2920 = vmul.f32 1.0, %v2919
      %v2921 = vrcp.pop %v2884
      %v2922 = vmul.f32 1.0, %v2921
      %v2923 = vrcp.pop %v2885
      %v2924 = vmul.f32 1.0, %v2923
      %v2925 = vrcp.pop %v2886
      %v2926 = vmul.f32 1.0, %v2925
      %v2927 = vrcp.pop %v2887
      %v2928 = vmul.f32 1.0, %v2927
      %v2929 = vrcp.pop %v2888
      %v2930 = vmul.f32 1.0, %v2929
      %v2931 = vrcp.pop %v2889
      %v2932 = vmul.f32 1.0, %v2931
      %v2933 = vrcp.pop %v2890
      %v2934 = vmul.f32 1.0, %v2933
      %v2935 = vrcp.pop %v2891
      %v2936 = vmul.f32 1.0, %v2935
      %v2937 = vrcp.pop %v2892
      %v2938 = vmul.f32 1.0, %v2937
      %v2939 = vrcp.pop %v2893
      %v2940 = vmul.f32 1.0, %v2939
      %v2941 = vrcp.pop %v2894
      %v2942 = vmul.f32 1.0, %v2941
      %v2943 = vrcp.pop %v2895
      %v2944 = vmul.f32 1.0, %v2943
      %v2945 = vrcp.pop %v2896
      %v2946 = vmul.f32 1.0, %v2945
      %v2947 = vrcp.pop %v2897
      %v2948 = vmul.f32 1.0, %v2947
      %v2949 = vrcp.pop %v2898
      %v2950 = vmul.f32 1.0, %v2949
      %v2951 = vrcp.pop %v2899
      %v2952 = vmul.f32 1.0, %v2951
      %v2953 = vrcp.pop %v2900
      %v2954 = vmul.f32 1.0, %v2953
      %v2955 = vrcp.pop %v2901
      %v2956 = vmul.f32 1.0, %v2955
      %v2957 = vrcp.pop %v2902
      %v2958 = vmul.f32 1.0, %v2957
      %v2959 = vrcp.pop %v2903
      %v2960 = vmul.f32 1.0, %v2959
      %v2961 = vrcp.pop %v2904
      %v2962 = vmul.f32 1.0, %v2961
      %v2963 = vrcp.pop %v2905
      %v2964 = vmul.f32 1.0, %v2963
      %v2965 = vrcp.pop %v2906
      %v2966 = vmul.f32 1.0, %v2965
      %v2967 = vrcp.pop %v2907
      %v2968 = vmul.f32 1.0, %v2967
      %v2969 = vrcp.pop %v2908
      %v2970 = vmul.f32 1.0, %v2969
      %v2971 = vrcp.pop %v2909
      %v2972 = vmul.f32 1.0, %v2971
      %v2973 = vrcp.pop %v2910
      %v2974 = vmul.f32 1.0, %v2973
      %vm2975 = vcmask 7168
      %2976 = vst.msk [vmem:[%s439] sm:$0xff] %vm2975, %v2912
      %2977 = vst.msk [vmem:[%s439 + $0x8] sm:$0xff] %vm2975, %v2914
      %2978 = vst.msk [vmem:[%s439 + $0x10] sm:$0xff] %vm2975, %v2916
      %2979 = vst.msk [vmem:[%s439 + $0x18] sm:$0xff] %vm2975, %v2918
      %2980 = vst.msk [vmem:[%s439 + $0x20] sm:$0xff] %vm2975, %v2920
      %2981 = vst.msk [vmem:[%s439 + $0x28] sm:$0xff] %vm2975, %v2922
      %2982 = vst.msk [vmem:[%s439 + $0x30] sm:$0xff] %vm2975, %v2924
      %2983 = vst.msk [vmem:[%s439 + $0x38] sm:$0xff] %vm2975, %v2926
      %2984 = vst.msk [vmem:[%s439 + $0x40] sm:$0xff] %vm2975, %v2928
      %2985 = vst.msk [vmem:[%s439 + $0x48] sm:$0xff] %vm2975, %v2930
      %2986 = vst.msk [vmem:[%s439 + $0x50] sm:$0xff] %vm2975, %v2932
      %2987 = vst.msk [vmem:[%s439 + $0x58] sm:$0xff] %vm2975, %v2934
      %2988 = vst.msk [vmem:[%s439 + $0x60] sm:$0xff] %vm2975, %v2936
      %2989 = vst.msk [vmem:[%s439 + $0x68] sm:$0xff] %vm2975, %v2938
      %2990 = vst.msk [vmem:[%s439 + $0x70] sm:$0xff] %vm2975, %v2940
      %2991 = vst.msk [vmem:[%s439 + $0x78] sm:$0xff] %vm2975, %v2942
      %2992 = vst.msk [vmem:[%s439 + $0x80] sm:$0xff] %vm2975, %v2944
      %2993 = vst.msk [vmem:[%s439 + $0x88] sm:$0xff] %vm2975, %v2946
      %2994 = vst.msk [vmem:[%s439 + $0x90] sm:$0xff] %vm2975, %v2948
      %2995 = vst.msk [vmem:[%s439 + $0x98] sm:$0xff] %vm2975, %v2950
      %2996 = vst.msk [vmem:[%s439 + $0xa0] sm:$0xff] %vm2975, %v2952
      %2997 = vst.msk [vmem:[%s439 + $0xa8] sm:$0xff] %vm2975, %v2954
      %2998 = vst.msk [vmem:[%s439 + $0xb0] sm:$0xff] %vm2975, %v2956
      %2999 = vst.msk [vmem:[%s439 + $0xb8] sm:$0xff] %vm2975, %v2958
      %3000 = vst.msk [vmem:[%s439 + $0xc0] sm:$0xff] %vm2975, %v2960
      %3001 = vst.msk [vmem:[%s439 + $0xc8] sm:$0xff] %vm2975, %v2962
      %3002 = vst.msk [vmem:[%s439 + $0xd0] sm:$0xff] %vm2975, %v2964
      %3003 = vst.msk [vmem:[%s439 + $0xd8] sm:$0xff] %vm2975, %v2966
      %3004 = vst.msk [vmem:[%s439 + $0xe0] sm:$0xff] %vm2975, %v2968
      %3005 = vst.msk [vmem:[%s439 + $0xe8] sm:$0xff] %vm2975, %v2970
      %3006 = vst.msk [vmem:[%s439 + $0xf0] sm:$0xff] %vm2975, %v2972
      %3007 = vst.msk [vmem:[%s439 + $0xf8] sm:$0xff] %vm2975, %v2974
      %s3008 = smul.u32 32, %s25
      %p3009 = scmp.lt.s32.totalorder %s3008, 63
      %s3010 = scalar_select %p3009, %s3008, 63
      %s3011 = smul.addr %s3010, 8
      %s3012 = scalar_lea.vmem %s12, %s3011
      // Predicated region
      $region69: #{tpu_custom_call.1} parent=67 // pred_check
        %p3013 = pneg %p305
      $region70: #{tpu_custom_call.1} parent=67 // pred_check_branch
        %3015 = sbr.rel (%p3013) target = $region72
      $region71: #{tpu_custom_call.1} parent=67 // pred_region
        %s3016 = smul.u32 32, %s25
      $region72: #{tpu_custom_call.1} parent=67 // pred_fallthru
        _
    $region68: #{tpu_custom_call.1} parent=5 // pred_fallthru
      _
    %p3017 = scmp.le.s32.totalorder 2, %s20
    // Predicated region
    $region73: #{tpu_custom_call.1} parent=5 // pred_check
      %p3018 = pneg %p3017
    $region74: #{tpu_custom_call.1} parent=5 // pred_check_branch
      %3020 = sbr.rel (%p3018) target = $region76
    $region75: #{tpu_custom_call.1} parent=5 // pred_region
      %s3021 = ssub.s32 %s20, 2
      // Predicated region
      $region77: #{tpu_custom_call.1} parent=75 // pred_check
        %p3022 = pneg %p311
      $region78: #{tpu_custom_call.1} parent=75 // pred_check_branch
        %3024 = sbr.rel (%p3022) target = $region80
      $region79: #{tpu_custom_call.1} parent=75 // pred_region
        %s3025 = smul.u32 32, %s26
        %p3026 = scmp.lt.s32.totalorder %s3025, 63
        %s3027 = scalar_select %p3026, %s3025, 63
        %s3028 = smul.addr %s3027, 8
        %s3029 = scalar_lea.vmem %s12, %s3028
      $region80: #{tpu_custom_call.1} parent=75 // pred_fallthru
        _
    $region76: #{tpu_custom_call.1} parent=5 // pred_fallthru
      _
  $region6: #{tpu_custom_call.1} parent=0 // loop_footer
    %s24 = sadd.s32 1, %s20
  $region7: #{tpu_custom_call.1} parent=0 // loop_footer_branch
    %19 = sbr.rel target = $region3
  $region8: #{tpu_custom_call.1} parent=0 // loop_exit
    _

</llo_original>
